<compile_context>
chip_gen: v7x
topology: tpu7x:2x2x1
jax: 0.10.0
libtpu: 0.0.40
codegen_flags: <defaults>
</compile_context>

<pallas_src>
import functools
import math

import numpy as np
import jax
import jax.numpy as jnp
from jax.experimental import pallas as pl
from jax.experimental.pallas import tpu as pltpu

# ---------------- configuration (small, consistent with the module) ----------
D_MODEL = 32      # d_model
NHEAD   = 4       # nhead
HEAD_D  = D_MODEL // NHEAD
SEQ     = 8       # number of queries (L)
BATCH   = 2       # N
LN_EPS  = 1e-5


# ---------------- Pallas kernel ----------------------------------------------
def self_attn_stack_kernel(tgt_ref, pos_ref, mask_ref, w_ref, vec_ref,
                           out_ref, act_ref, *, n_heads, head_d):
    """One grid step == one SelfAttentionLayer.  Activation is resident in VMEM.

    tgt_ref/pos_ref : (T, E)      seq-first flatten, row t -> batch t % N
    mask_ref        : (T, T)      precomputed additive batch mask (0 / -1e30)
    w_ref           : (1, E, 4E)  per-layer [Wq^T*s | Wk^T | Wv^T | Wo^T]
    vec_ref         : (1, 8, E)   per-layer rows: bq*s, bv, bo, gamma, beta, pad
    act_ref         : (T, E)      VMEM scratch: activation carried across layers
    """
    layer = pl.program_id(0)

    @pl.when(layer == 0)
    def _():
        act_ref[...] = tgt_ref[...]

    tgt = act_ref[...]                                  # (T, E) current activation
    T, E = tgt.shape
    qk_in = tgt + pos_ref[...]                          # with_pos_embed

    w = w_ref[0]                                        # (E, 4E)
    vec = vec_ref[0]                                    # (8, E)

    # One fused matmul for Q and K (shared LHS), one matmul for V.
    qk = jnp.dot(qk_in, w[:, :2 * E], preferred_element_type=jnp.float32)
    q = qk[:, :E] + vec[0:1, :]                         # bq (scale pre-folded)
    k = qk[:, E:2 * E]                                  # bk dropped: softmax no-op
    v = jnp.dot(tgt, w[:, 2 * E:3 * E],
                preferred_element_type=jnp.float32) + vec[1:2, :]

    # Heads-batched attention: split heads with an XLU relayout, one batched
    # score matmul, ONE fused softmax over (H, T, T), one batched P@V matmul.
    qh = jnp.transpose(q.reshape(T, n_heads, head_d), (1, 0, 2))   # (H, T, Dh)
    kh = jnp.transpose(k.reshape(T, n_heads, head_d), (1, 0, 2))
    vh = jnp.transpose(v.reshape(T, n_heads, head_d), (1, 0, 2))

    s = jnp.einsum("htd,hsd->hts", qh, kh, preferred_element_type=jnp.float32)
    s = s + mask_ref[...][None]                         # additive batch mask
    s = s - jnp.max(s, axis=-1, keepdims=True)
    p = jnp.exp(s)
    p = p * pl.reciprocal(jnp.sum(p, axis=-1, keepdims=True))
    o = jnp.einsum("hts,hsd->htd", p, vh, preferred_element_type=jnp.float32)

    # Re-pack heads onto the lane axis and apply the out-projection as ONE matmul.
    o2 = jnp.transpose(o, (1, 0, 2)).reshape(T, E)                 # (T, H*Dh) = (T, E)
    proj = jnp.dot(o2, w[:, 3 * E:4 * E],
                   preferred_element_type=jnp.float32) + vec[2:3, :]

    # residual + LayerNorm
    x = tgt + proj
    mean = jnp.mean(x, axis=-1, keepdims=True)
    var = jnp.mean((x - mean) ** 2, axis=-1, keepdims=True)
    y = (x - mean) * jax.lax.rsqrt(var + LN_EPS)
    y = y * vec[3:4, :] + vec[4:5, :]                   # LN gamma, beta

    act_ref[...] = y                                    # feeds the next layer

    @pl.when(layer == pl.num_programs(0) - 1)
    def _():
        out_ref[...] = y.astype(out_ref.dtype)


# ---------------- host-side parameter repacking (done once) -------------------
def prepare_stack(params_list):
    """Pack torch-convention weights of a stack of layers into kernel slabs."""
    scale = 1.0 / math.sqrt(HEAD_D)
    ws, vs = [], []
    for p in params_list:
        w = jnp.concatenate([p["wq"].T * scale,          # scale folded into Wq^T
                             p["wk"].T,
                             p["wv"].T,
                             p["wo"].T], axis=1)         # (E, 4E) = (32, 128)
        vec = jnp.concatenate([p["bq"] * scale,          # scale folded into bq
                               p["bv"], p["bo"],
                               p["gamma"], p["beta"],
                               jnp.zeros((3, D_MODEL), jnp.float32)],
                              axis=0)                    # (8, E), sublane aligned
        ws.append(w)
        vs.append(vec)
    return jnp.stack(ws, axis=0), jnp.stack(vs, axis=0)  # (Lyr,E,4E), (Lyr,8,E)


def make_batch_mask(L, N):
    """Additive (T, T) mask separating batch elements after the (L,N,E) flatten."""
    t = np.arange(L * N)
    same = (t[:, None] % N) == (t[None, :] % N)
    return jnp.asarray(np.where(same, 0.0, -1e30).astype(np.float32))


# ---------------- wrapper -----------------------------------------------------
@jax.jit
def self_attention_stack(tgt, query_pos, w_stack, vec_stack, mask):
    """Runs `num_layers` SelfAttentionLayers under one pallas_call.

    tgt, query_pos: (L, N, E) float32 (torch seq-first layout).
    Single-layer module forward == num_layers = 1.
    """
    L, N, E = tgt.shape
    T = L * N
    num_layers = w_stack.shape[0]
    head_d = E // NHEAD

    # Row-major (L, N, E) -> (L*N, E) is a free metadata reshape (no transpose,
    # no HBM round trip).  Batch separation is handled by the additive mask.
    tgt_f = tgt.reshape(T, E)
    pos_f = query_pos.reshape(T, E)

    kernel = functools.partial(self_attn_stack_kernel,
                               n_heads=NHEAD, head_d=head_d)

    out = pl.pallas_call(
        kernel,
        out_shape=jax.ShapeDtypeStruct((T, E), jnp.float32),
        grid_spec=pltpu.PrefetchScalarGridSpec(
            num_scalar_prefetch=0,
            grid=(num_layers,),
            in_specs=[
                pl.BlockSpec((T, E), lambda i: (0, 0)),          # tgt (layer 0 only)
                pl.BlockSpec((T, E), lambda i: (0, 0)),          # query_pos
                pl.BlockSpec((T, T), lambda i: (0, 0)),          # batch mask
                pl.BlockSpec((1, E, 4 * E), lambda i: (i, 0, 0)),  # per-layer weights
                pl.BlockSpec((1, 8, E), lambda i: (i, 0, 0)),      # per-layer vectors
            ],
            out_specs=pl.BlockSpec((T, E), lambda i: (0, 0)),
            scratch_shapes=[pltpu.VMEM((T, E), jnp.float32)],    # resident activation
        ),
        compiler_params=pltpu.CompilerParams(
            dimension_semantics=("arbitrary",)),                 # sequential layers
    )(tgt_f, pos_f, mask, w_stack, vec_stack)

    return out.reshape(L, N, E)


# ---------------- reference (pure JAX) for validation -------------------------
def reference(tgt, query_pos, params):
    qk_in = tgt + query_pos
    q = jnp.einsum("lne,fe->lnf", qk_in, params["wq"]) + params["bq"][0]
    k = jnp.einsum("lne,fe->lnf", qk_in, params["wk"]) + params["bk"][0]
    v = jnp.einsum("lne,fe->lnf", tgt,   params["wv"]) + params["bv"][0]
    L, N, E = tgt.shape
    qh = q.reshape(L, N, NHEAD, HEAD_D) / math.sqrt(HEAD_D)
    kh = k.reshape(L, N, NHEAD, HEAD_D)
    vh = v.reshape(L, N, NHEAD, HEAD_D)
    s = jnp.einsum("lnhd,mnhd->nhlm", qh, kh)
    p = jax.nn.softmax(s, axis=-1)
    o = jnp.einsum("nhlm,mnhd->lnhd", p, vh).reshape(L, N, E)
    proj = jnp.einsum("lne,fe->lnf", o, params["wo"]) + params["bo"][0]
    x = tgt + proj
    mean = jnp.mean(x, axis=-1, keepdims=True)
    var = jnp.mean((x - mean) ** 2, axis=-1, keepdims=True)
    return (x - mean) * jax.lax.rsqrt(var + LN_EPS) * params["gamma"][0] + params["beta"][0]


# ---------------- deterministic parameter init --------------------------------
def xavier_uniform(key, shape):
    fan_out, fan_in = shape
    bound = math.sqrt(6.0 / (fan_in + fan_out))
    return jax.random.uniform(key, shape, jnp.float32, -bound, bound)


def init_params(key):
    ks = jax.random.split(key, 8)
    # in_proj_weight is a single (3E, E) matrix in torch; xavier over the full matrix.
    in_proj = xavier_uniform(ks[0], (3 * D_MODEL, D_MODEL))
    wq, wk, wv = in_proj[:D_MODEL], in_proj[D_MODEL:2 * D_MODEL], in_proj[2 * D_MODEL:]
    wo = xavier_uniform(ks[1], (D_MODEL, D_MODEL))
    # torch defaults are zero biases / unit gamma; use small non-zero values so
    # every parameter path (bias folding, LN affine) is exercised by the check.
    small = lambda k: 0.1 * jax.random.normal(k, (1, D_MODEL), jnp.float32)
    return {
        "wq": wq, "wk": wk, "wv": wv,
        "bq": small(ks[2]), "bk": small(ks[3]), "bv": small(ks[4]),
        "wo": wo, "bo": small(ks[5]),
        "gamma": 1.0 + small(ks[6]),
        "beta": small(ks[7]),
    }


if __name__ == "__main__":
    NUM_LAYERS = 3
    key = jax.random.PRNGKey(0)
    keys = jax.random.split(key, NUM_LAYERS + 2)

    params_list = [init_params(keys[i]) for i in range(NUM_LAYERS)]
    w_stack, vec_stack = prepare_stack(params_list)     # host-side, once-per-model
    mask = make_batch_mask(SEQ, BATCH)

    tgt = jax.random.normal(keys[-2], (SEQ, BATCH, D_MODEL), jnp.float32)
    query_pos = jax.random.normal(keys[-1], (SEQ, BATCH, D_MODEL), jnp.float32)

    # (a) single layer -- exactly the PyTorch module's forward.
    out1 = self_attention_stack(tgt, query_pos, w_stack[:1], vec_stack[:1], mask)
    out1 = jax.block_until_ready(out1)
    ref1 = reference(tgt, query_pos, params_list[0])
    np.testing.assert_allclose(np.asarray(out1), np.asarray(ref1),
                               atol=2e-3, rtol=2e-3)

    # (b) full decoder stack amortized under one pallas_call (one launch, weights
    #     streamed per grid step, activation resident in VMEM).
    outN = self_attention_stack(tgt, query_pos, w_stack, vec_stack, mask)
    outN = jax.block_until_ready(outN)
    refN = tgt
    for p in params_list:
        refN = reference(refN, query_pos, p)
    np.testing.assert_allclose(np.asarray(outN), np.asarray(refN),
                               atol=5e-3, rtol=5e-3)

    print("KERNEL_OK")
</pallas_src>

<mosaic_0001>
module attributes {stable_mosaic.version = 11 : i64} {
  func.func @self_attn_stack_kernel(%arg0: i32, %arg1: memref<16x32xf32, #tpu.memory_space<vmem>>, %arg2: memref<16x32xf32, #tpu.memory_space<vmem>>, %arg3: memref<16x16xf32, #tpu.memory_space<vmem>>, %arg4: memref<1x32x128xf32, #tpu.memory_space<vmem>>, %arg5: memref<1x8x32xf32, #tpu.memory_space<vmem>>, %arg6: memref<16x32xf32, #tpu.memory_space<vmem>>, %arg7: memref<16x32xf32, #tpu.memory_space<vmem>>) attributes {dimension_semantics = [#tpu.dimension_semantics<arbitrary>], iteration_bounds = array<i64: 1>, scalar_prefetch = 0 : i64, scratch_operands = 1 : i64, tpu.core_type = #tpu.core_type<tc>, window_params = [{pipeline_mode = #tpu.pipeline_mode<synchronous>, transform_indices = @transform_0, window_bounds = array<i64: 16, 32>}, {pipeline_mode = #tpu.pipeline_mode<synchronous>, transform_indices = @transform_1, window_bounds = array<i64: 16, 32>}, {pipeline_mode = #tpu.pipeline_mode<synchronous>, transform_indices = @transform_2, window_bounds = array<i64: 16, 16>}, {transform_indices = @transform_3, window_bounds = array<i64: 1, 32, 128>}, {transform_indices = @transform_4, window_bounds = array<i64: 1, 8, 32>}, {pipeline_mode = #tpu.pipeline_mode<synchronous>, transform_indices = @transform_5, window_bounds = array<i64: 16, 32>}]} {
    %c0_i32 = arith.constant 0 : i32
    %0 = arith.cmpi eq, %arg0, %c0_i32 : i32
    %1 = arith.extui %0 : i1 to i32
    %c0_i32_0 = arith.constant 0 : i32
    %2 = arith.cmpi ne, %1, %c0_i32_0 : i32
    scf.if %2 {
      %c0_27 = arith.constant 0 : index
      %c0_28 = arith.constant 0 : index
      %80 = vector.load %arg1[%c0_27, %c0_28] : memref<16x32xf32, #tpu.memory_space<vmem>>, vector<16x32xf32>
      %c0_29 = arith.constant 0 : index
      %c0_30 = arith.constant 0 : index
      %81 = vector.load %arg7[%c0_29, %c0_30] : memref<16x32xf32, #tpu.memory_space<vmem>>, vector<16x32xf32>
      tpu.vector_store %arg7[%c0_29, %c0_30], %80 {strides = array<i32>} : memref<16x32xf32, #tpu.memory_space<vmem>>, vector<16x32xf32>,
    } else {
    }
    %c0 = arith.constant 0 : index
    %c0_1 = arith.constant 0 : index
    %3 = vector.load %arg7[%c0, %c0_1] : memref<16x32xf32, #tpu.memory_space<vmem>>, vector<16x32xf32>
    %c0_2 = arith.constant 0 : index
    %c0_3 = arith.constant 0 : index
    %4 = vector.load %arg2[%c0_2, %c0_3] : memref<16x32xf32, #tpu.memory_space<vmem>>, vector<16x32xf32>
    %5 = arith.addf %3, %4 : vector<16x32xf32>
    %c0_4 = arith.constant 0 : index
    %c0_5 = arith.constant 0 : index
    %c0_6 = arith.constant 0 : index
    %6 = vector.load %arg4[%c0_4, %c0_5, %c0_6] : memref<1x32x128xf32, #tpu.memory_space<vmem>>, vector<1x32x128xf32>
    %7 = vector.shape_cast %6 : vector<1x32x128xf32> to vector<32x128xf32>
    %c0_7 = arith.constant 0 : index
    %c0_8 = arith.constant 0 : index
    %c0_9 = arith.constant 0 : index
    %8 = vector.load %arg5[%c0_7, %c0_8, %c0_9] : memref<1x8x32xf32, #tpu.memory_space<vmem>>, vector<1x8x32xf32>
    %9 = vector.shape_cast %8 : vector<1x8x32xf32> to vector<8x32xf32>
    %10 = vector.extract_strided_slice %7 {offsets = [0, 0], sizes = [32, 64], strides = [1, 1]} : vector<32x128xf32> to vector<32x64xf32>
    %cst = arith.constant dense<0.000000e+00> : vector<16x64xf32>
    %11 = tpu.matmul %5, %10, %cst {dimension_numbers = #tpu.dot_dimension_numbers<[1], [0], [0], [1], [0, 0, 1, 1], [], []>} : vector<16x32xf32>, vector<32x64xf32>, vector<16x64xf32> -> vector<16x64xf32>
    %12 = vector.extract_strided_slice %11 {offsets = [0, 0], sizes = [16, 32], strides = [1, 1]} : vector<16x64xf32> to vector<16x32xf32>
    %13 = vector.extract_strided_slice %9 {offsets = [0, 0], sizes = [1, 32], strides = [1, 1]} : vector<8x32xf32> to vector<1x32xf32>
    %14 = vector.broadcast %13 : vector<1x32xf32> to vector<16x32xf32>
    %15 = arith.addf %12, %14 : vector<16x32xf32>
    %16 = vector.extract_strided_slice %11 {offsets = [0, 32], sizes = [16, 32], strides = [1, 1]} : vector<16x64xf32> to vector<16x32xf32>
    %17 = vector.extract_strided_slice %7 {offsets = [0, 64], sizes = [32, 32], strides = [1, 1]} : vector<32x128xf32> to vector<32x32xf32>
    %cst_10 = arith.constant dense<0.000000e+00> : vector<16x32xf32>
    %18 = tpu.matmul %3, %17, %cst_10 {dimension_numbers = #tpu.dot_dimension_numbers<[1], [0], [0], [1], [0, 0, 1, 1], [], []>} : vector<16x32xf32>, vector<32x32xf32>, vector<16x32xf32> -> vector<16x32xf32>
    %19 = vector.extract_strided_slice %9 {offsets = [1, 0], sizes = [1, 32], strides = [1, 1]} : vector<8x32xf32> to vector<1x32xf32>
    %20 = vector.broadcast %19 : vector<1x32xf32> to vector<16x32xf32>
    %21 = arith.addf %18, %20 : vector<16x32xf32>
    %22 = vector.shape_cast %15 : vector<16x32xf32> to vector<16x4x8xf32>
    %23 = tpu.transpose %22, [1, 0, 2] : vector<16x4x8xf32> -> vector<4x16x8xf32>
    %24 = vector.shape_cast %16 : vector<16x32xf32> to vector<16x4x8xf32>
    %25 = tpu.transpose %24, [1, 0, 2] : vector<16x4x8xf32> -> vector<4x16x8xf32>
    %26 = vector.shape_cast %21 : vector<16x32xf32> to vector<16x4x8xf32>
    %27 = tpu.transpose %26, [1, 0, 2] : vector<16x4x8xf32> -> vector<4x16x8xf32>
    "tpu.trace_start"() <{level = 10 : i32, message = "htd,hsd->hts"}> : () -> ()
    %cst_11 = arith.constant dense<0.000000e+00> : vector<4x16x16xf32>
    %28 = tpu.matmul %23, %25, %cst_11 {dimension_numbers = #tpu.dot_dimension_numbers<[2], [2], [1], [1], [0, 0, 0, 1, 1, 1], [0], [0]>} : vector<4x16x8xf32>, vector<4x16x8xf32>, vector<4x16x16xf32> -> vector<4x16x16xf32>
    "tpu.trace_stop"() : () -> ()
    %c0_12 = arith.constant 0 : index
    %c0_13 = arith.constant 0 : index
    %29 = vector.load %arg3[%c0_12, %c0_13] : memref<16x16xf32, #tpu.memory_space<vmem>>, vector<16x16xf32>
    %30 = vector.shape_cast %29 : vector<16x16xf32> to vector<1x16x16xf32>
    %31 = vector.broadcast %30 : vector<1x16x16xf32> to vector<4x16x16xf32>
    %32 = arith.addf %28, %31 : vector<4x16x16xf32>
    %cst_14 = arith.constant dense<0xFF800000> : vector<4x16xf32>
    %33 = vector.multi_reduction <maximumf>, %32, %cst_14 [2] : vector<4x16x16xf32> to vector<4x16xf32>
    %34 = vector.shape_cast %33 : vector<4x16xf32> to vector<4x16x1xf32>
    %35 = vector.broadcast %34 : vector<4x16x1xf32> to vector<4x16x16xf32>
    %36 = arith.subf %32, %35 : vector<4x16x16xf32>
    %37 = math.exp %36 : vector<4x16x16xf32>
    %cst_15 = arith.constant dense<0.000000e+00> : vector<4x16xf32>
    %38 = vector.multi_reduction <add>, %37, %cst_15 [2] : vector<4x16x16xf32> to vector<4x16xf32>
    %39 = vector.shape_cast %38 : vector<4x16xf32> to vector<4x16x1xf32>
    %40 = tpu.reciprocal %39 : vector<4x16x1xf32> -> vector<4x16x1xf32>
    %41 = vector.broadcast %40 : vector<4x16x1xf32> to vector<4x16x16xf32>
    %42 = arith.mulf %37, %41 : vector<4x16x16xf32>
    "tpu.trace_start"() <{level = 10 : i32, message = "hts,hsd->htd"}> : () -> ()
    %cst_16 = arith.constant dense<0.000000e+00> : vector<4x16x8xf32>
    %43 = tpu.matmul %42, %27, %cst_16 {dimension_numbers = #tpu.dot_dimension_numbers<[2], [1], [1], [2], [0, 0, 0, 1, 1, 2], [0], [0]>} : vector<4x16x16xf32>, vector<4x16x8xf32>, vector<4x16x8xf32> -> vector<4x16x8xf32>
    "tpu.trace_stop"() : () -> ()
    %44 = tpu.transpose %43, [1, 0, 2] : vector<4x16x8xf32> -> vector<16x4x8xf32>
    %45 = vector.shape_cast %44 : vector<16x4x8xf32> to vector<16x32xf32>
    %46 = vector.extract_strided_slice %7 {offsets = [0, 96], sizes = [32, 32], strides = [1, 1]} : vector<32x128xf32> to vector<32x32xf32>
    %cst_17 = arith.constant dense<0.000000e+00> : vector<16x32xf32>
    %47 = tpu.matmul %45, %46, %cst_17 {dimension_numbers = #tpu.dot_dimension_numbers<[1], [0], [0], [1], [0, 0, 1, 1], [], []>} : vector<16x32xf32>, vector<32x32xf32>, vector<16x32xf32> -> vector<16x32xf32>
    %48 = vector.extract_strided_slice %9 {offsets = [2, 0], sizes = [1, 32], strides = [1, 1]} : vector<8x32xf32> to vector<1x32xf32>
    %49 = vector.broadcast %48 : vector<1x32xf32> to vector<16x32xf32>
    %50 = arith.addf %47, %49 : vector<16x32xf32>
    %51 = arith.addf %3, %50 : vector<16x32xf32>
    %cst_18 = arith.constant dense<0.000000e+00> : vector<16xf32>
    %52 = vector.multi_reduction <add>, %51, %cst_18 [1] : vector<16x32xf32> to vector<16xf32>
    %53 = vector.shape_cast %52 : vector<16xf32> to vector<16x1xf32>
    %cst_19 = arith.constant 3.200000e+01 : f32
    %54 = vector.broadcast %cst_19 : f32 to vector<16x1xf32>
    %55 = arith.divf %53, %54 : vector<16x1xf32>
    %56 = vector.broadcast %55 : vector<16x1xf32> to vector<16x32xf32>
    %57 = arith.subf %51, %56 : vector<16x32xf32>
    %58 = arith.mulf %57, %57 : vector<16x32xf32>
    %cst_20 = arith.constant dense<0.000000e+00> : vector<16xf32>
    %59 = vector.multi_reduction <add>, %58, %cst_20 [1] : vector<16x32xf32> to vector<16xf32>
    %60 = vector.shape_cast %59 : vector<16xf32> to vector<16x1xf32>
    %cst_21 = arith.constant 3.200000e+01 : f32
    %61 = vector.broadcast %cst_21 : f32 to vector<16x1xf32>
    %62 = arith.divf %60, %61 : vector<16x1xf32>
    %63 = vector.broadcast %55 : vector<16x1xf32> to vector<16x32xf32>
    %64 = arith.subf %51, %63 : vector<16x32xf32>
    %cst_22 = arith.constant 9.99999974E-6 : f32
    %65 = vector.broadcast %cst_22 : f32 to vector<16x1xf32>
    %66 = arith.addf %62, %65 : vector<16x1xf32>
    %67 = math.rsqrt %66 : vector<16x1xf32>
    %68 = vector.broadcast %67 : vector<16x1xf32> to vector<16x32xf32>
    %69 = arith.mulf %64, %68 : vector<16x32xf32>
    %70 = vector.extract_strided_slice %9 {offsets = [3, 0], sizes = [1, 32], strides = [1, 1]} : vector<8x32xf32> to vector<1x32xf32>
    %71 = vector.broadcast %70 : vector<1x32xf32> to vector<16x32xf32>
    %72 = arith.mulf %69, %71 : vector<16x32xf32>
    %73 = vector.extract_strided_slice %9 {offsets = [4, 0], sizes = [1, 32], strides = [1, 1]} : vector<8x32xf32> to vector<1x32xf32>
    %74 = vector.broadcast %73 : vector<1x32xf32> to vector<16x32xf32>
    %75 = arith.addf %72, %74 : vector<16x32xf32>
    %c0_23 = arith.constant 0 : index
    %c0_24 = arith.constant 0 : index
    %76 = vector.load %arg7[%c0_23, %c0_24] : memref<16x32xf32, #tpu.memory_space<vmem>>, vector<16x32xf32>
    tpu.vector_store %arg7[%c0_23, %c0_24], %75 {strides = array<i32>} : memref<16x32xf32, #tpu.memory_space<vmem>>, vector<16x32xf32>,
    %c0_i32_25 = arith.constant 0 : i32
    %77 = arith.cmpi eq, %arg0, %c0_i32_25 : i32
    %78 = arith.extui %77 : i1 to i32
    %c0_i32_26 = arith.constant 0 : i32
    %79 = arith.cmpi ne, %78, %c0_i32_26 : i32
    scf.if %79 {
      %c0_27 = arith.constant 0 : index
      %c0_28 = arith.constant 0 : index
      %80 = vector.load %arg6[%c0_27, %c0_28] : memref<16x32xf32, #tpu.memory_space<vmem>>, vector<16x32xf32>
      tpu.vector_store %arg6[%c0_27, %c0_28], %75 {strides = array<i32>} : memref<16x32xf32, #tpu.memory_space<vmem>>, vector<16x32xf32>,
    } else {
    }
    return
  }
  func.func @transform_0(%arg0: i32) -> (i32, i32) {
    %c0_i32 = arith.constant 0 : i32
    %c0_i32_0 = arith.constant 0 : i32
    %c0_i32_1 = arith.constant 0 : i32
    return %c0_i32, %c0_i32_0 : i32, i32
  }
  func.func @transform_1(%arg0: i32) -> (i32, i32) {
    %c0_i32 = arith.constant 0 : i32
    %c0_i32_0 = arith.constant 0 : i32
    %c0_i32_1 = arith.constant 0 : i32
    return %c0_i32, %c0_i32_0 : i32, i32
  }
  func.func @transform_2(%arg0: i32) -> (i32, i32) {
    %c0_i32 = arith.constant 0 : i32
    %c0_i32_0 = arith.constant 0 : i32
    %c0_i32_1 = arith.constant 0 : i32
    return %c0_i32, %c0_i32_0 : i32, i32
  }
  func.func @transform_3(%arg0: i32) -> (i32, i32, i32) {
    %c0_i32 = arith.constant 0 : i32
    %c0_i32_0 = arith.constant 0 : i32
    %c0_i32_1 = arith.constant 0 : i32
    return %arg0, %c0_i32, %c0_i32_0 : i32, i32, i32
  }
  func.func @transform_4(%arg0: i32) -> (i32, i32, i32) {
    %c0_i32 = arith.constant 0 : i32
    %c0_i32_0 = arith.constant 0 : i32
    %c0_i32_1 = arith.constant 0 : i32
    return %arg0, %c0_i32, %c0_i32_0 : i32, i32, i32
  }
  func.func @transform_5(%arg0: i32) -> (i32, i32) {
    %c0_i32 = arith.constant 0 : i32
    %c0_i32_0 = arith.constant 0 : i32
    %c0_i32_1 = arith.constant 0 : i32
    return %c0_i32, %c0_i32_0 : i32, i32
  }
}

</mosaic_0001>

<llo_original>
// kernel: self_attention_stack.1
$region0: #{self_attention_stack.1}
  #allocation0 [shape = 'u32[]', space=smem, size = 0x4, offset = 0x4, fixed_abs, tag = 'smem constant byte address 0x4 - core index']
  #allocation1 [shape = 'u32[144,128]{1,0:T(1,128)}', space=vmem, size = 0x12000, scoped, tag = 'internal scratch']
  #allocation2 [shape = 'f32[16,32]{1,0:T(8,128)}', space=vmem, size = 0x2000, scoped, tag = 'scratch operand']
  %s0 = inlined_call_operand.hbm [shape: f32[16,32], index: 0, kind: input, shape index: {}]
  %s1 = inlined_call_operand.hbm [shape: f32[16,32], index: 1, kind: input, shape index: {}]
  %s2 = inlined_call_operand.vmem [shape: f32[16,16], index: 2, kind: input, shape index: {}]
  %s3 = inlined_call_operand.hbm [shape: f32[1,32,128], index: 3, kind: input, shape index: {}]
  %s4 = inlined_call_operand.hbm [shape: f32[1,8,32], index: 4, kind: input, shape index: {}]
  %s5 = inlined_call_operand.hbm [shape: f32[16,32], index: 5, kind: output, shape index: {}]
  %s6 = sld [smem:[#allocation0]]
  $region54: #{self_attention_stack.1} parent=0
    _
  %s8 = ssub.s32 1, %s6
  %s9 = scalar_select 0, %s8, %s6
  $region1: #{self_attention_stack.1} parent=0
    #allocation3 [shape = 'u8[8192]{0}', space=vmem, size = 0x2000, scoped, tag = 'input window, operand 0, single buffered']
    #allocation4 [shape = 's32[1]{0}', space=sflag, size = 0x4, scoped, tag = 'scoped memory for self_attention_stack.1']
    #allocation5 [shape = 's32[1]{0}', space=sflag, size = 0x4, scoped, tag = 'scoped memory for self_attention_stack.1']
    #allocation6 [shape = 'u8[8192]{0}', space=vmem, size = 0x2000, scoped, tag = 'input window, operand 1, single buffered']
    #allocation7 [shape = 's32[1]{0}', space=sflag, size = 0x4, scoped, tag = 'scoped memory for self_attention_stack.1']
    #allocation8 [shape = 'u8[16384]{0}', space=vmem, size = 0x4000, scoped, tag = 'input window, operand 3, single buffered']
    #allocation9 [shape = 'u8[4096]{0}', space=vmem, size = 0x1000, scoped, tag = 'input window, operand 4, single buffered']
    #allocation10 [shape = 's32[1]{0}', space=sflag, size = 0x4, scoped, tag = 'scoped memory for self_attention_stack.1']
    #allocation11 [shape = 'u8[8192]{0}', space=vmem, size = 0x2000, scoped, tag = 'output window, operand 0, single buffered']
    %10 = vsyncpa [#allocation4], 0
    %11 = vsyncpa [#allocation7], 0
    %12 = vsyncpa [#allocation10], 0
    %13 = vsyncpa [#allocation5], 0
    // Predicated region
    $region2: #{self_attention_stack.1} parent=1 // pred_check
      _
    $region3: #{self_attention_stack.1} parent=1 // pred_check_branch
      %15 = sbr.rel (0) target = $region5
    $region4: #{self_attention_stack.1} parent=1 // pred_region
      %s17 = ssub.s32 256, 256
      %18 = vsyncadd [#allocation4], %s17
      %s19 = sshll.u32 [#allocation3], 4
      %s20 = int_to_ptr.vmem [resolvable:$true] %s19
      %25 = dma.hbm_to_vmem [thread:$0]  %s0, 256, %s20, [#allocation4], 128, 128, 8
    $region5: #{self_attention_stack.1} parent=1 // pred_fallthru
      _
    // Predicated region
    $region6: #{self_attention_stack.1} parent=1 // pred_check
      _
    $region7: #{self_attention_stack.1} parent=1 // pred_check_branch
      %27 = sbr.rel (0) target = $region9
    $region8: #{self_attention_stack.1} parent=1 // pred_region
      %s29 = ssub.s32 256, 256
      %30 = vsyncadd [#allocation7], %s29
      %s31 = sshll.u32 [#allocation6], 4
      %s32 = int_to_ptr.vmem [resolvable:$true] %s31
      %37 = dma.hbm_to_vmem [thread:$0]  %s1, 256, %s32, [#allocation7], 128, 128, 8
    $region9: #{self_attention_stack.1} parent=1 // pred_fallthru
      _
    // Predicated region
    $region10: #{self_attention_stack.1} parent=1 // pred_check
      _
    $region11: #{self_attention_stack.1} parent=1 // pred_check_branch
      %39 = sbr.rel (0) target = $region13
    $region12: #{self_attention_stack.1} parent=1 // pred_region
      _
    $region13: #{self_attention_stack.1} parent=1 // pred_fallthru
      _
    // Predicated region
    $region14: #{self_attention_stack.1} parent=1 // pred_check
      _
    $region15: #{self_attention_stack.1} parent=1 // pred_check_branch
      %41 = sbr.rel (0) target = $region17
    $region16: #{self_attention_stack.1} parent=1 // pred_region
      %s43 = ssub.s32 512, 512
      %44 = vsyncadd [#allocation7], %s43
      %s45 = sshll.u32 [#allocation8], 4
      %s46 = int_to_ptr.vmem [resolvable:$true] %s45
      %51 = dma.hbm_to_vmem [thread:$0]  %s3, 512, %s46, [#allocation7], 128, 128, 8
    $region17: #{self_attention_stack.1} parent=1 // pred_fallthru
      _
    // Predicated region
    $region18: #{self_attention_stack.1} parent=1 // pred_check
      _
    $region19: #{self_attention_stack.1} parent=1 // pred_check_branch
      %53 = sbr.rel (0) target = $region21
    $region20: #{self_attention_stack.1} parent=1 // pred_region
      %s55 = ssub.s32 128, 128
      %56 = vsyncadd [#allocation10], %s55
      %s58 = sshll.u32 [#allocation9], 4
      %s59 = int_to_ptr.vmem [resolvable:$true] %s58
      %61 = dma.hbm_to_vmem [thread:$0]  %s4, 128, %s59, [#allocation10]
    $region21: #{self_attention_stack.1} parent=1 // pred_fallthru
      _
    // Predicated region
    $region22: #{self_attention_stack.1} parent=1 // pred_check
      _
    $region23: #{self_attention_stack.1} parent=1 // pred_check_branch
      %63 = sbr.rel (0) target = $region25
    $region24: #{self_attention_stack.1} parent=1 // pred_region
      %64 = dma.done [#allocation4], 256
    $region25: #{self_attention_stack.1} parent=1 // pred_fallthru
      _
    // Predicated region
    $region26: #{self_attention_stack.1} parent=1 // pred_check
      _
    $region27: #{self_attention_stack.1} parent=1 // pred_check_branch
      %66 = sbr.rel (0) target = $region29
    $region28: #{self_attention_stack.1} parent=1 // pred_region
      %67 = dma.done [#allocation7], 256
    $region29: #{self_attention_stack.1} parent=1 // pred_fallthru
      _
    // Predicated region
    $region30: #{self_attention_stack.1} parent=1 // pred_check
      _
    $region31: #{self_attention_stack.1} parent=1 // pred_check_branch
      %69 = sbr.rel (0) target = $region33
    $region32: #{self_attention_stack.1} parent=1 // pred_region
      %70 = dma.done [#allocation7], 512
    $region33: #{self_attention_stack.1} parent=1 // pred_fallthru
      _
    // Predicated region
    $region34: #{self_attention_stack.1} parent=1 // pred_check
      _
    $region35: #{self_attention_stack.1} parent=1 // pred_check_branch
      %72 = sbr.rel (0) target = $region37
    $region36: #{self_attention_stack.1} parent=1 // pred_region
      %73 = dma.done [#allocation10], 128
    $region37: #{self_attention_stack.1} parent=1 // pred_fallthru
      _
    %p74 = scmp.eq.s32.totalorder 0, 0
    // Predicated region
    $region38: #{self_attention_stack.1} parent=1 // pred_check
      %p75 = pneg %p74
    $region39: #{self_attention_stack.1} parent=1 // pred_check_branch
      %77 = sbr.rel (%p75) target = $region41
    $region40: #{self_attention_stack.1} parent=1 // pred_region
      %v78 = vld [vmem:[#allocation3] sm:$0xff]
      %v79 = vld [vmem:[#allocation3 + $0x8] sm:$0xff]
      %vm80 = vcmask 261120
      %81 = vst.msk [vmem:[#allocation2] sm:$0xff] %vm80, %v78
      %82 = vst.msk [vmem:[#allocation2 + $0x8] sm:$0xff] %vm80, %v79
    $region41: #{self_attention_stack.1} parent=1 // pred_fallthru
      _
    %v83 = vld [vmem:[#allocation2] sm:$0xff]
    %v84 = vld [vmem:[#allocation2 + $0x8] sm:$0xff]
    %v85 = vld [vmem:[#allocation6] sm:$0xff]
    %v86 = vld [vmem:[#allocation6 + $0x8] sm:$0xff]
    %v87 = vadd.f32 %v83, %v85
    %v88 = vadd.f32 %v84, %v86
    %v89 = vld [vmem:[#allocation8] sm:$0xff]
    %v90 = vld [vmem:[#allocation8 + $0x8] sm:$0xff]
    %v91 = vld [vmem:[#allocation8 + $0x10] sm:$0xff]
    %v92 = vld [vmem:[#allocation8 + $0x18] sm:$0xff]
    %v93 = vld [vmem:[#allocation9] sm:$0xff]
    %vm94 = vcmask 261120
    %v96 = vsel %vm94, %v87, 0
    %v99 = vsel %vm94, %v88, 0
    %101 = vmatprep.subr.mxu0 0.0
    %102 = vmatpush1.msra.mxu0 %v89
    %103 = vmatprep.subr.mxu0 0.0
    %104 = vmatpush1.msra.mxu0 %v90
    %105 = vmatprep.subr.mxu0 0.0
    %106 = vmatpush1.msra.mxu0 %v91
    %107 = vmatprep.subr.mxu0 0.0
    %108 = vmatpush1.msra.mxu0 %v92
    %109 = vmatprep.subr.mxu0 0.0
    %110 = vmatpush1.msra.mxu0 0.0
    %111 = vmatprep.subr.mxu0 0.0
    %112 = vmatpush1.msra.mxu0 0.0
    %113 = vmatprep.subr.mxu0 0.0
    %114 = vmatpush1.msra.mxu0 0.0
    %115 = vmatprep.subr.mxu0 0.0
    %116 = vmatpush1.msra.mxu0 0.0
    %117 = vmatprep.subr.mxu0 0.0
    %118 = vmatpush1.msra.mxu0 0.0
    %119 = vmatprep.subr.mxu0 0.0
    %120 = vmatpush1.msra.mxu0 0.0
    %121 = vmatprep.subr.mxu0 0.0
    %122 = vmatpush1.msra.mxu0 0.0
    %123 = vmatprep.subr.mxu0 0.0
    %124 = vmatpush1.msra.mxu0 0.0
    %125 = vmatprep.subr.mxu0 0.0
    %126 = vmatpush1.msra.mxu0 0.0
    %127 = vmatprep.subr.mxu0 0.0
    %128 = vmatpush1.msra.mxu0 0.0
    %129 = vmatprep.subr.mxu0 0.0
    %130 = vmatpush1.msra.mxu0 0.0
    %131 = vmatprep.subr.mxu0 0.0
    %132 = vmatpush1.msra.mxu0 0.0
    %133 = vmatprep.subr.mxu0 0.0
    %134 = vmatpush1.msra.mxu0 0.0
    %135 = vmatprep.subr.mxu0 0.0
    %136 = vmatpush1.msra.mxu0 0.0
    %137 = vmatprep.subr.mxu0 0.0
    %138 = vmatpush1.msra.mxu0 0.0
    %139 = vmatprep.subr.mxu0 0.0
    %140 = vmatpush1.msra.mxu0 0.0
    %141 = vmatprep.subr.mxu0 0.0
    %142 = vmatpush1.msra.mxu0 0.0
    %143 = vmatprep.subr.mxu0 0.0
    %144 = vmatpush1.msra.mxu0 0.0
    %145 = vmatprep.subr.mxu0 0.0
    %146 = vmatpush1.msra.mxu0 0.0
    %147 = vmatprep.subr.mxu0 0.0
    %148 = vmatpush1.msra.mxu0 0.0
    %149 = vmatprep.subr.mxu0 0.0
    %150 = vmatpush1.msra.mxu0 0.0
    %151 = vmatprep.subr.mxu0 0.0
    %152 = vmatpush1.msra.mxu0 0.0
    %153 = vmatprep.subr.mxu0 0.0
    %154 = vmatpush1.msra.mxu0 0.0
    %155 = vmatprep.subr.mxu0 0.0
    %156 = vmatpush1.msra.mxu0 0.0
    %157 = vmatprep.subr.mxu0 0.0
    %158 = vmatpush1.msra.mxu0 0.0
    %159 = vmatprep.subr.mxu0 0.0
    %160 = vmatpush1.msra.mxu0 0.0
    %161 = vmatprep.subr.mxu0 0.0
    %162 = vmatpush1.msra.mxu0 0.0
    %163 = vmatprep.subr.mxu0 0.0
    %164 = vmatpush1.msra.mxu0 0.0
    %165 = vmatprep.mubr.f32.mxu0 0.0
    %166 = vmatmul.mubr.f32.gmra.mrb[0].mxu0 %v96
    %v167 = vpop.f32.mrb[0].mxu0
    %v168 = vadd.f32 0.0, %v167
    %v169 = vpop.f32.mrb[0].mxu0
    %170 = vmatprep.mubr.f32.mxu0 0.0
    %171 = vmatmul.mubr.f32.gmra.mrb[0].mxu0 %v99
    %v172 = vpop.f32.mrb[0].mxu0
    %v173 = vadd.f32 0.0, %v172
    %v174 = vpop.f32.mrb[0].mxu0
    %175 = vdwg.mxu0
    %v176 = vlaneseq
    %v177 = vshrl.u32 %v176, 7
    %v178 = vsub.s32 0, %v177
    %v179 = vrot.slane %v93, %v178
    %v180 = vadd.f32 %v168, %v179
    %v181 = vadd.f32 %v173, %v179
    %v182 = vlaneseq
    %v183 = vshrl.u32 %v182, 7
    %v184 = vsub.s32 1, %v183
    %v185 = vrot.slane %v93, %v184
    %190 = vrot.lane.b32.xlu0 %v89, 64
    %v191 = vpop.permute.xlu0 %190
    %192 = vrot.lane.b32.xlu0 %v90, 64
    %v193 = vpop.permute.xlu0 %192
    %194 = vrot.lane.b32.xlu0 %v91, 64
    %v195 = vpop.permute.xlu0 %194
    %196 = vrot.lane.b32.xlu0 %v92, 64
    %v197 = vpop.permute.xlu0 %196
    %v203 = vsel %vm94, %v83, 0
    %v206 = vsel %vm94, %v84, 0
    %208 = vmatprep.subr.mxu0 0.0
    %209 = vmatpush1.msra.mxu0 %v191
    %210 = vmatprep.subr.mxu0 0.0
    %211 = vmatpush1.msra.mxu0 %v193
    %212 = vmatprep.subr.mxu0 0.0
    %213 = vmatpush1.msra.mxu0 %v195
    %214 = vmatprep.subr.mxu0 0.0
    %215 = vmatpush1.msra.mxu0 %v197
    %216 = vmatprep.subr.mxu0 0.0
    %217 = vmatpush1.msra.mxu0 0.0
    %218 = vmatprep.subr.mxu0 0.0
    %219 = vmatpush1.msra.mxu0 0.0
    %220 = vmatprep.subr.mxu0 0.0
    %221 = vmatpush1.msra.mxu0 0.0
    %222 = vmatprep.subr.mxu0 0.0
    %223 = vmatpush1.msra.mxu0 0.0
    %224 = vmatprep.subr.mxu0 0.0
    %225 = vmatpush1.msra.mxu0 0.0
    %226 = vmatprep.subr.mxu0 0.0
    %227 = vmatpush1.msra.mxu0 0.0
    %228 = vmatprep.subr.mxu0 0.0
    %229 = vmatpush1.msra.mxu0 0.0
    %230 = vmatprep.subr.mxu0 0.0
    %231 = vmatpush1.msra.mxu0 0.0
    %232 = vmatprep.subr.mxu0 0.0
    %233 = vmatpush1.msra.mxu0 0.0
    %234 = vmatprep.subr.mxu0 0.0
    %235 = vmatpush1.msra.mxu0 0.0
    %236 = vmatprep.subr.mxu0 0.0
    %237 = vmatpush1.msra.mxu0 0.0
    %238 = vmatprep.subr.mxu0 0.0
    %239 = vmatpush1.msra.mxu0 0.0
    %240 = vmatprep.subr.mxu0 0.0
    %241 = vmatpush1.msra.mxu0 0.0
    %242 = vmatprep.subr.mxu0 0.0
    %243 = vmatpush1.msra.mxu0 0.0
    %244 = vmatprep.subr.mxu0 0.0
    %245 = vmatpush1.msra.mxu0 0.0
    %246 = vmatprep.subr.mxu0 0.0
    %247 = vmatpush1.msra.mxu0 0.0
    %248 = vmatprep.subr.mxu0 0.0
    %249 = vmatpush1.msra.mxu0 0.0
    %250 = vmatprep.subr.mxu0 0.0
    %251 = vmatpush1.msra.mxu0 0.0
    %252 = vmatprep.subr.mxu0 0.0
    %253 = vmatpush1.msra.mxu0 0.0
    %254 = vmatprep.subr.mxu0 0.0
    %255 = vmatpush1.msra.mxu0 0.0
    %256 = vmatprep.subr.mxu0 0.0
    %257 = vmatpush1.msra.mxu0 0.0
    %258 = vmatprep.subr.mxu0 0.0
    %259 = vmatpush1.msra.mxu0 0.0
    %260 = vmatprep.subr.mxu0 0.0
    %261 = vmatpush1.msra.mxu0 0.0
    %262 = vmatprep.subr.mxu0 0.0
    %263 = vmatpush1.msra.mxu0 0.0
    %264 = vmatprep.subr.mxu0 0.0
    %265 = vmatpush1.msra.mxu0 0.0
    %266 = vmatprep.subr.mxu0 0.0
    %267 = vmatpush1.msra.mxu0 0.0
    %268 = vmatprep.subr.mxu0 0.0
    %269 = vmatpush1.msra.mxu0 0.0
    %270 = vmatprep.subr.mxu0 0.0
    %271 = vmatpush1.msra.mxu0 0.0
    %272 = vmatprep.mubr.f32.mxu0 0.0
    %273 = vmatmul.mubr.f32.gmra.mrb[0].mxu0 %v203
    %v274 = vpop.f32.mrb[0].mxu0
    %v275 = vadd.f32 %v185, %v274
    %v276 = vpop.f32.mrb[0].mxu0
    %277 = vmatprep.mubr.f32.mxu0 0.0
    %278 = vmatmul.mubr.f32.gmra.mrb[0].mxu0 %v206
    %v279 = vpop.f32.mrb[0].mxu0
    %v280 = vadd.f32 %v185, %v279
    %v281 = vpop.f32.mrb[0].mxu0
    %282 = vdwg.mxu0
    %285 = vrot.lane.b32.xlu0 %v180, 120
    %v286 = vpop.permute.xlu0 %285
    %287 = vrot.lane.b32.xlu0 %v181, 120
    %v288 = vpop.permute.xlu0 %287
    %291 = vrot.lane.b32.xlu0 %v180, 112
    %v292 = vpop.permute.xlu0 %291
    %293 = vrot.lane.b32.xlu0 %v181, 112
    %v294 = vpop.permute.xlu0 %293
    %297 = vrot.lane.b32.xlu0 %v180, 104
    %v298 = vpop.permute.xlu0 %297
    %299 = vrot.lane.b32.xlu0 %v181, 104
    %v300 = vpop.permute.xlu0 %299
    %v303 = vcombine.low %v180, %v292
    %v304 = vcombine.high %v180, %v292
    %v306 = vunpack.c.l.s4 1983009808
    %v307 = vunpack.c.0.s8 %v306
    %v308 = vlaneseq
    %v309 = vshrl.u32 %v308, 7
    %v310 = vsub.s32 %v307, %v309
    %v311 = vrot.slane %v303, %v310
    %v313 = vunpack.c.l.s4 1983009808
    %v314 = vunpack.c.0.s8 %v313
    %v315 = vlaneseq
    %v316 = vshrl.u32 %v315, 7
    %v317 = vsub.s32 %v314, %v316
    %v318 = vrot.slane %v304, %v317
    %v319 = vcombine.low %v286, %v298
    %v320 = vcombine.high %v286, %v298
    %v322 = vunpack.c.l.s4 1983009808
    %v323 = vunpack.c.0.s8 %v322
    %v324 = vlaneseq
    %v325 = vshrl.u32 %v324, 7
    %v326 = vsub.s32 %v323, %v325
    %v327 = vrot.slane %v319, %v326
    %v329 = vunpack.c.l.s4 1983009808
    %v330 = vunpack.c.0.s8 %v329
    %v331 = vlaneseq
    %v332 = vshrl.u32 %v331, 7
    %v333 = vsub.s32 %v330, %v332
    %v334 = vrot.slane %v320, %v333
    %v335 = vcombine.low %v311, %v327
    %v336 = vcombine.high %v311, %v327
    %v338 = vunpack.c.l.s4 1934713408
    %v339 = vunpack.c.0.s8 %v338
    %v340 = vlaneseq
    %v341 = vshrl.u32 %v340, 7
    %v342 = vsub.s32 %v339, %v341
    %v343 = vrot.slane %v335, %v342
    %v345 = vunpack.c.l.s4 1934713408
    %v346 = vunpack.c.0.s8 %v345
    %v347 = vlaneseq
    %v348 = vshrl.u32 %v347, 7
    %v349 = vsub.s32 %v346, %v348
    %v350 = vrot.slane %v336, %v349
    %v351 = vcombine.low %v318, %v334
    %v352 = vcombine.high %v318, %v334
    %v354 = vunpack.c.l.s4 1934713408
    %v355 = vunpack.c.0.s8 %v354
    %v356 = vlaneseq
    %v357 = vshrl.u32 %v356, 7
    %v358 = vsub.s32 %v355, %v357
    %v359 = vrot.slane %v351, %v358
    %v361 = vunpack.c.l.s4 1934713408
    %v362 = vunpack.c.0.s8 %v361
    %v363 = vlaneseq
    %v364 = vshrl.u32 %v363, 7
    %v365 = vsub.s32 %v362, %v364
    %v366 = vrot.slane %v352, %v365
    %v367 = vcombine.high %v343, 0.0
    %v368 = vcombine.high %v350, 0.0
    %v369 = vcombine.high %v359, 0.0
    %v370 = vcombine.high %v366, 0.0
    %v371 = vcombine.low %v181, %v294
    %v372 = vcombine.high %v181, %v294
    %v374 = vunpack.c.l.s4 1983009808
    %v375 = vunpack.c.0.s8 %v374
    %v376 = vlaneseq
    %v377 = vshrl.u32 %v376, 7
    %v378 = vsub.s32 %v375, %v377
    %v379 = vrot.slane %v371, %v378
    %v381 = vunpack.c.l.s4 1983009808
    %v382 = vunpack.c.0.s8 %v381
    %v383 = vlaneseq
    %v384 = vshrl.u32 %v383, 7
    %v385 = vsub.s32 %v382, %v384
    %v386 = vrot.slane %v372, %v385
    %v387 = vcombine.low %v288, %v300
    %v388 = vcombine.high %v288, %v300
    %v390 = vunpack.c.l.s4 1983009808
    %v391 = vunpack.c.0.s8 %v390
    %v392 = vlaneseq
    %v393 = vshrl.u32 %v392, 7
    %v394 = vsub.s32 %v391, %v393
    %v395 = vrot.slane %v387, %v394
    %v397 = vunpack.c.l.s4 1983009808
    %v398 = vunpack.c.0.s8 %v397
    %v399 = vlaneseq
    %v400 = vshrl.u32 %v399, 7
    %v401 = vsub.s32 %v398, %v400
    %v402 = vrot.slane %v388, %v401
    %v403 = vcombine.low %v379, %v395
    %v404 = vcombine.high %v379, %v395
    %v406 = vunpack.c.l.s4 1934713408
    %v407 = vunpack.c.0.s8 %v406
    %v408 = vlaneseq
    %v409 = vshrl.u32 %v408, 7
    %v410 = vsub.s32 %v407, %v409
    %v411 = vrot.slane %v403, %v410
    %v413 = vunpack.c.l.s4 1934713408
    %v414 = vunpack.c.0.s8 %v413
    %v415 = vlaneseq
    %v416 = vshrl.u32 %v415, 7
    %v417 = vsub.s32 %v414, %v416
    %v418 = vrot.slane %v404, %v417
    %v419 = vcombine.low %v386, %v402
    %v420 = vcombine.high %v386, %v402
    %v422 = vunpack.c.l.s4 1934713408
    %v423 = vunpack.c.0.s8 %v422
    %v424 = vlaneseq
    %v425 = vshrl.u32 %v424, 7
    %v426 = vsub.s32 %v423, %v425
    %v427 = vrot.slane %v419, %v426
    %v429 = vunpack.c.l.s4 1934713408
    %v430 = vunpack.c.0.s8 %v429
    %v431 = vlaneseq
    %v432 = vshrl.u32 %v431, 7
    %v433 = vsub.s32 %v430, %v432
    %v434 = vrot.slane %v420, %v433
    %v435 = vcombine.high %v411, 0.0
    %v436 = vcombine.high %v418, 0.0
    %v437 = vcombine.high %v427, 0.0
    %v438 = vcombine.high %v434, 0.0
    %v439 = vcombine.low %v343, %v350
    %v441 = vunpack.c.l.s4 1983009808
    %v442 = vunpack.c.0.s8 %v441
    %v443 = vlaneseq
    %v444 = vshrl.u32 %v443, 7
    %v445 = vsub.s32 %v442, %v444
    %v446 = vrot.slane %v439, %v445
    %v447 = vcombine.low %v367, %v368
    %v449 = vunpack.c.l.s4 1983009808
    %v450 = vunpack.c.0.s8 %v449
    %v451 = vlaneseq
    %v452 = vshrl.u32 %v451, 7
    %v453 = vsub.s32 %v450, %v452
    %v454 = vrot.slane %v447, %v453
    %v455 = vcombine.low %v359, %v366
    %v457 = vunpack.c.l.s4 1983009808
    %v458 = vunpack.c.0.s8 %v457
    %v459 = vlaneseq
    %v460 = vshrl.u32 %v459, 7
    %v461 = vsub.s32 %v458, %v460
    %v462 = vrot.slane %v455, %v461
    %v463 = vcombine.low %v369, %v370
    %v465 = vunpack.c.l.s4 1983009808
    %v466 = vunpack.c.0.s8 %v465
    %v467 = vlaneseq
    %v468 = vshrl.u32 %v467, 7
    %v469 = vsub.s32 %v466, %v468
    %v470 = vrot.slane %v463, %v469
    %v471 = vcombine.low %v446, %v454
    %v472 = vcombine.high %v446, %v454
    %v474 = vunpack.c.l.s4 1934713408
    %v475 = vunpack.c.0.s8 %v474
    %v476 = vlaneseq
    %v477 = vshrl.u32 %v476, 7
    %v478 = vsub.s32 %v475, %v477
    %v479 = vrot.slane %v471, %v478
    %v481 = vunpack.c.l.s4 1934713408
    %v482 = vunpack.c.0.s8 %v481
    %v483 = vlaneseq
    %v484 = vshrl.u32 %v483, 7
    %v485 = vsub.s32 %v482, %v484
    %v486 = vrot.slane %v472, %v485
    %v487 = vcombine.low %v462, %v470
    %v488 = vcombine.high %v462, %v470
    %v490 = vunpack.c.l.s4 1934713408
    %v491 = vunpack.c.0.s8 %v490
    %v492 = vlaneseq
    %v493 = vshrl.u32 %v492, 7
    %v494 = vsub.s32 %v491, %v493
    %v495 = vrot.slane %v487, %v494
    %v497 = vunpack.c.l.s4 1934713408
    %v498 = vunpack.c.0.s8 %v497
    %v499 = vlaneseq
    %v500 = vshrl.u32 %v499, 7
    %v501 = vsub.s32 %v498, %v500
    %v502 = vrot.slane %v488, %v501
    %v503 = vcombine.low %v479, %v495
    %v504 = vcombine.high %v479, %v495
    %v505 = vcombine.low %v486, %v502
    %v506 = vcombine.high %v486, %v502
    %v507 = vcombine.low %v411, %v418
    %v509 = vunpack.c.l.s4 1983009808
    %v510 = vunpack.c.0.s8 %v509
    %v511 = vlaneseq
    %v512 = vshrl.u32 %v511, 7
    %v513 = vsub.s32 %v510, %v512
    %v514 = vrot.slane %v507, %v513
    %v515 = vcombine.low %v435, %v436
    %v517 = vunpack.c.l.s4 1983009808
    %v518 = vunpack.c.0.s8 %v517
    %v519 = vlaneseq
    %v520 = vshrl.u32 %v519, 7
    %v521 = vsub.s32 %v518, %v520
    %v522 = vrot.slane %v515, %v521
    %v523 = vcombine.low %v427, %v434
    %v525 = vunpack.c.l.s4 1983009808
    %v526 = vunpack.c.0.s8 %v525
    %v527 = vlaneseq
    %v528 = vshrl.u32 %v527, 7
    %v529 = vsub.s32 %v526, %v528
    %v530 = vrot.slane %v523, %v529
    %v531 = vcombine.low %v437, %v438
    %v533 = vunpack.c.l.s4 1983009808
    %v534 = vunpack.c.0.s8 %v533
    %v535 = vlaneseq
    %v536 = vshrl.u32 %v535, 7
    %v537 = vsub.s32 %v534, %v536
    %v538 = vrot.slane %v531, %v537
    %v539 = vcombine.low %v514, %v522
    %v540 = vcombine.high %v514, %v522
    %v542 = vunpack.c.l.s4 1934713408
    %v543 = vunpack.c.0.s8 %v542
    %v544 = vlaneseq
    %v545 = vshrl.u32 %v544, 7
    %v546 = vsub.s32 %v543, %v545
    %v547 = vrot.slane %v539, %v546
    %v549 = vunpack.c.l.s4 1934713408
    %v550 = vunpack.c.0.s8 %v549
    %v551 = vlaneseq
    %v552 = vshrl.u32 %v551, 7
    %v553 = vsub.s32 %v550, %v552
    %v554 = vrot.slane %v540, %v553
    %v555 = vcombine.low %v530, %v538
    %v556 = vcombine.high %v530, %v538
    %v558 = vunpack.c.l.s4 1934713408
    %v559 = vunpack.c.0.s8 %v558
    %v560 = vlaneseq
    %v561 = vshrl.u32 %v560, 7
    %v562 = vsub.s32 %v559, %v561
    %v563 = vrot.slane %v555, %v562
    %v565 = vunpack.c.l.s4 1934713408
    %v566 = vunpack.c.0.s8 %v565
    %v567 = vlaneseq
    %v568 = vshrl.u32 %v567, 7
    %v569 = vsub.s32 %v566, %v568
    %v570 = vrot.slane %v556, %v569
    %v571 = vcombine.low %v547, %v563
    %v572 = vcombine.high %v547, %v563
    %v573 = vcombine.low %v554, %v570
    %v574 = vcombine.high %v554, %v570
    %577 = vrot.lane.b32.xlu0 %v168, 120
    %v578 = vpop.permute.xlu0 %577
    %579 = vrot.lane.b32.xlu0 %v173, 120
    %v580 = vpop.permute.xlu0 %579
    %581 = vrot.lane.b32.xlu0 %v168, 112
    %v582 = vpop.permute.xlu0 %581
    %583 = vrot.lane.b32.xlu0 %v173, 112
    %v584 = vpop.permute.xlu0 %583
    %585 = vrot.lane.b32.xlu0 %v168, 104
    %v586 = vpop.permute.xlu0 %585
    %587 = vrot.lane.b32.xlu0 %v173, 104
    %v588 = vpop.permute.xlu0 %587
    %589 = vrot.lane.b32.xlu0 %v168, 96
    %v590 = vpop.permute.xlu0 %589
    %591 = vrot.lane.b32.xlu0 %v173, 96
    %v592 = vpop.permute.xlu0 %591
    %593 = vrot.lane.b32.xlu0 %v578, 96
    %v594 = vpop.permute.xlu0 %593
    %595 = vrot.lane.b32.xlu0 %v580, 96
    %v596 = vpop.permute.xlu0 %595
    %597 = vrot.lane.b32.xlu0 %v582, 96
    %v598 = vpop.permute.xlu0 %597
    %599 = vrot.lane.b32.xlu0 %v584, 96
    %v600 = vpop.permute.xlu0 %599
    %601 = vrot.lane.b32.xlu0 %v586, 96
    %v602 = vpop.permute.xlu0 %601
    %603 = vrot.lane.b32.xlu0 %v588, 96
    %v604 = vpop.permute.xlu0 %603
    %v613 = vcombine.low %v590, %v598
    %v614 = vcombine.high %v590, %v598
    %v616 = vunpack.c.l.s4 1983009808
    %v617 = vunpack.c.0.s8 %v616
    %v618 = vlaneseq
    %v619 = vshrl.u32 %v618, 7
    %v620 = vsub.s32 %v617, %v619
    %v621 = vrot.slane %v613, %v620
    %v623 = vunpack.c.l.s4 1983009808
    %v624 = vunpack.c.0.s8 %v623
    %v625 = vlaneseq
    %v626 = vshrl.u32 %v625, 7
    %v627 = vsub.s32 %v624, %v626
    %v628 = vrot.slane %v614, %v627
    %v629 = vcombine.low %v594, %v602
    %v630 = vcombine.high %v594, %v602
    %v632 = vunpack.c.l.s4 1983009808
    %v633 = vunpack.c.0.s8 %v632
    %v634 = vlaneseq
    %v635 = vshrl.u32 %v634, 7
    %v636 = vsub.s32 %v633, %v635
    %v637 = vrot.slane %v629, %v636
    %v639 = vunpack.c.l.s4 1983009808
    %v640 = vunpack.c.0.s8 %v639
    %v641 = vlaneseq
    %v642 = vshrl.u32 %v641, 7
    %v643 = vsub.s32 %v640, %v642
    %v644 = vrot.slane %v630, %v643
    %v645 = vcombine.low %v621, %v637
    %v646 = vcombine.high %v621, %v637
    %v648 = vunpack.c.l.s4 1934713408
    %v649 = vunpack.c.0.s8 %v648
    %v650 = vlaneseq
    %v651 = vshrl.u32 %v650, 7
    %v652 = vsub.s32 %v649, %v651
    %v653 = vrot.slane %v645, %v652
    %v655 = vunpack.c.l.s4 1934713408
    %v656 = vunpack.c.0.s8 %v655
    %v657 = vlaneseq
    %v658 = vshrl.u32 %v657, 7
    %v659 = vsub.s32 %v656, %v658
    %v660 = vrot.slane %v646, %v659
    %v661 = vcombine.low %v628, %v644
    %v662 = vcombine.high %v628, %v644
    %v664 = vunpack.c.l.s4 1934713408
    %v665 = vunpack.c.0.s8 %v664
    %v666 = vlaneseq
    %v667 = vshrl.u32 %v666, 7
    %v668 = vsub.s32 %v665, %v667
    %v669 = vrot.slane %v661, %v668
    %v671 = vunpack.c.l.s4 1934713408
    %v672 = vunpack.c.0.s8 %v671
    %v673 = vlaneseq
    %v674 = vshrl.u32 %v673, 7
    %v675 = vsub.s32 %v672, %v674
    %v676 = vrot.slane %v662, %v675
    %v677 = vcombine.high %v653, 0.0
    %v678 = vcombine.high %v660, 0.0
    %v679 = vcombine.high %v669, 0.0
    %v680 = vcombine.high %v676, 0.0
    %v681 = vcombine.low %v592, %v600
    %v682 = vcombine.high %v592, %v600
    %v684 = vunpack.c.l.s4 1983009808
    %v685 = vunpack.c.0.s8 %v684
    %v686 = vlaneseq
    %v687 = vshrl.u32 %v686, 7
    %v688 = vsub.s32 %v685, %v687
    %v689 = vrot.slane %v681, %v688
    %v691 = vunpack.c.l.s4 1983009808
    %v692 = vunpack.c.0.s8 %v691
    %v693 = vlaneseq
    %v694 = vshrl.u32 %v693, 7
    %v695 = vsub.s32 %v692, %v694
    %v696 = vrot.slane %v682, %v695
    %v697 = vcombine.low %v596, %v604
    %v698 = vcombine.high %v596, %v604
    %v700 = vunpack.c.l.s4 1983009808
    %v701 = vunpack.c.0.s8 %v700
    %v702 = vlaneseq
    %v703 = vshrl.u32 %v702, 7
    %v704 = vsub.s32 %v701, %v703
    %v705 = vrot.slane %v697, %v704
    %v707 = vunpack.c.l.s4 1983009808
    %v708 = vunpack.c.0.s8 %v707
    %v709 = vlaneseq
    %v710 = vshrl.u32 %v709, 7
    %v711 = vsub.s32 %v708, %v710
    %v712 = vrot.slane %v698, %v711
    %v713 = vcombine.low %v689, %v705
    %v714 = vcombine.high %v689, %v705
    %v716 = vunpack.c.l.s4 1934713408
    %v717 = vunpack.c.0.s8 %v716
    %v718 = vlaneseq
    %v719 = vshrl.u32 %v718, 7
    %v720 = vsub.s32 %v717, %v719
    %v721 = vrot.slane %v713, %v720
    %v723 = vunpack.c.l.s4 1934713408
    %v724 = vunpack.c.0.s8 %v723
    %v725 = vlaneseq
    %v726 = vshrl.u32 %v725, 7
    %v727 = vsub.s32 %v724, %v726
    %v728 = vrot.slane %v714, %v727
    %v729 = vcombine.low %v696, %v712
    %v730 = vcombine.high %v696, %v712
    %v732 = vunpack.c.l.s4 1934713408
    %v733 = vunpack.c.0.s8 %v732
    %v734 = vlaneseq
    %v735 = vshrl.u32 %v734, 7
    %v736 = vsub.s32 %v733, %v735
    %v737 = vrot.slane %v729, %v736
    %v739 = vunpack.c.l.s4 1934713408
    %v740 = vunpack.c.0.s8 %v739
    %v741 = vlaneseq
    %v742 = vshrl.u32 %v741, 7
    %v743 = vsub.s32 %v740, %v742
    %v744 = vrot.slane %v730, %v743
    %v745 = vcombine.high %v721, 0.0
    %v746 = vcombine.high %v728, 0.0
    %v747 = vcombine.high %v737, 0.0
    %v748 = vcombine.high %v744, 0.0
    %v749 = vcombine.low %v653, %v660
    %v751 = vunpack.c.l.s4 1983009808
    %v752 = vunpack.c.0.s8 %v751
    %v753 = vlaneseq
    %v754 = vshrl.u32 %v753, 7
    %v755 = vsub.s32 %v752, %v754
    %v756 = vrot.slane %v749, %v755
    %v757 = vcombine.low %v677, %v678
    %v759 = vunpack.c.l.s4 1983009808
    %v760 = vunpack.c.0.s8 %v759
    %v761 = vlaneseq
    %v762 = vshrl.u32 %v761, 7
    %v763 = vsub.s32 %v760, %v762
    %v764 = vrot.slane %v757, %v763
    %v765 = vcombine.low %v669, %v676
    %v767 = vunpack.c.l.s4 1983009808
    %v768 = vunpack.c.0.s8 %v767
    %v769 = vlaneseq
    %v770 = vshrl.u32 %v769, 7
    %v771 = vsub.s32 %v768, %v770
    %v772 = vrot.slane %v765, %v771
    %v773 = vcombine.low %v679, %v680
    %v775 = vunpack.c.l.s4 1983009808
    %v776 = vunpack.c.0.s8 %v775
    %v777 = vlaneseq
    %v778 = vshrl.u32 %v777, 7
    %v779 = vsub.s32 %v776, %v778
    %v780 = vrot.slane %v773, %v779
    %v781 = vcombine.low %v756, %v764
    %v782 = vcombine.high %v756, %v764
    %v784 = vunpack.c.l.s4 1934713408
    %v785 = vunpack.c.0.s8 %v784
    %v786 = vlaneseq
    %v787 = vshrl.u32 %v786, 7
    %v788 = vsub.s32 %v785, %v787
    %v789 = vrot.slane %v781, %v788
    %v791 = vunpack.c.l.s4 1934713408
    %v792 = vunpack.c.0.s8 %v791
    %v793 = vlaneseq
    %v794 = vshrl.u32 %v793, 7
    %v795 = vsub.s32 %v792, %v794
    %v796 = vrot.slane %v782, %v795
    %v797 = vcombine.low %v772, %v780
    %v798 = vcombine.high %v772, %v780
    %v800 = vunpack.c.l.s4 1934713408
    %v801 = vunpack.c.0.s8 %v800
    %v802 = vlaneseq
    %v803 = vshrl.u32 %v802, 7
    %v804 = vsub.s32 %v801, %v803
    %v805 = vrot.slane %v797, %v804
    %v807 = vunpack.c.l.s4 1934713408
    %v808 = vunpack.c.0.s8 %v807
    %v809 = vlaneseq
    %v810 = vshrl.u32 %v809, 7
    %v811 = vsub.s32 %v808, %v810
    %v812 = vrot.slane %v798, %v811
    %v813 = vcombine.low %v789, %v805
    %v814 = vcombine.high %v789, %v805
    %v815 = vcombine.low %v796, %v812
    %v816 = vcombine.high %v796, %v812
    %v817 = vcombine.low %v721, %v728
    %v819 = vunpack.c.l.s4 1983009808
    %v820 = vunpack.c.0.s8 %v819
    %v821 = vlaneseq
    %v822 = vshrl.u32 %v821, 7
    %v823 = vsub.s32 %v820, %v822
    %v824 = vrot.slane %v817, %v823
    %v825 = vcombine.low %v745, %v746
    %v827 = vunpack.c.l.s4 1983009808
    %v828 = vunpack.c.0.s8 %v827
    %v829 = vlaneseq
    %v830 = vshrl.u32 %v829, 7
    %v831 = vsub.s32 %v828, %v830
    %v832 = vrot.slane %v825, %v831
    %v833 = vcombine.low %v737, %v744
    %v835 = vunpack.c.l.s4 1983009808
    %v836 = vunpack.c.0.s8 %v835
    %v837 = vlaneseq
    %v838 = vshrl.u32 %v837, 7
    %v839 = vsub.s32 %v836, %v838
    %v840 = vrot.slane %v833, %v839
    %v841 = vcombine.low %v747, %v748
    %v843 = vunpack.c.l.s4 1983009808
    %v844 = vunpack.c.0.s8 %v843
    %v845 = vlaneseq
    %v846 = vshrl.u32 %v845, 7
    %v847 = vsub.s32 %v844, %v846
    %v848 = vrot.slane %v841, %v847
    %v849 = vcombine.low %v824, %v832
    %v850 = vcombine.high %v824, %v832
    %v852 = vunpack.c.l.s4 1934713408
    %v853 = vunpack.c.0.s8 %v852
    %v854 = vlaneseq
    %v855 = vshrl.u32 %v854, 7
    %v856 = vsub.s32 %v853, %v855
    %v857 = vrot.slane %v849, %v856
    %v859 = vunpack.c.l.s4 1934713408
    %v860 = vunpack.c.0.s8 %v859
    %v861 = vlaneseq
    %v862 = vshrl.u32 %v861, 7
    %v863 = vsub.s32 %v860, %v862
    %v864 = vrot.slane %v850, %v863
    %v865 = vcombine.low %v840, %v848
    %v866 = vcombine.high %v840, %v848
    %v868 = vunpack.c.l.s4 1934713408
    %v869 = vunpack.c.0.s8 %v868
    %v870 = vlaneseq
    %v871 = vshrl.u32 %v870, 7
    %v872 = vsub.s32 %v869, %v871
    %v873 = vrot.slane %v865, %v872
    %v875 = vunpack.c.l.s4 1934713408
    %v876 = vunpack.c.0.s8 %v875
    %v877 = vlaneseq
    %v878 = vshrl.u32 %v877, 7
    %v879 = vsub.s32 %v876, %v878
    %v880 = vrot.slane %v866, %v879
    %v881 = vcombine.low %v857, %v873
    %v882 = vcombine.high %v857, %v873
    %v883 = vcombine.low %v864, %v880
    %v884 = vcombine.high %v864, %v880
    %887 = vrot.lane.b32.xlu0 %v275, 120
    %v888 = vpop.permute.xlu0 %887
    %889 = vrot.lane.b32.xlu0 %v280, 120
    %v890 = vpop.permute.xlu0 %889
    %893 = vrot.lane.b32.xlu0 %v275, 112
    %v894 = vpop.permute.xlu0 %893
    %895 = vrot.lane.b32.xlu0 %v280, 112
    %v896 = vpop.permute.xlu0 %895
    %899 = vrot.lane.b32.xlu0 %v275, 104
    %v900 = vpop.permute.xlu0 %899
    %901 = vrot.lane.b32.xlu0 %v280, 104
    %v902 = vpop.permute.xlu0 %901
    %v905 = vcombine.low %v275, %v894
    %v906 = vcombine.high %v275, %v894
    %v908 = vunpack.c.l.s4 1983009808
    %v909 = vunpack.c.0.s8 %v908
    %v910 = vlaneseq
    %v911 = vshrl.u32 %v910, 7
    %v912 = vsub.s32 %v909, %v911
    %v913 = vrot.slane %v905, %v912
    %v915 = vunpack.c.l.s4 1983009808
    %v916 = vunpack.c.0.s8 %v915
    %v917 = vlaneseq
    %v918 = vshrl.u32 %v917, 7
    %v919 = vsub.s32 %v916, %v918
    %v920 = vrot.slane %v906, %v919
    %v921 = vcombine.low %v888, %v900
    %v922 = vcombine.high %v888, %v900
    %v924 = vunpack.c.l.s4 1983009808
    %v925 = vunpack.c.0.s8 %v924
    %v926 = vlaneseq
    %v927 = vshrl.u32 %v926, 7
    %v928 = vsub.s32 %v925, %v927
    %v929 = vrot.slane %v921, %v928
    %v931 = vunpack.c.l.s4 1983009808
    %v932 = vunpack.c.0.s8 %v931
    %v933 = vlaneseq
    %v934 = vshrl.u32 %v933, 7
    %v935 = vsub.s32 %v932, %v934
    %v936 = vrot.slane %v922, %v935
    %v937 = vcombine.low %v913, %v929
    %v938 = vcombine.high %v913, %v929
    %v940 = vunpack.c.l.s4 1934713408
    %v941 = vunpack.c.0.s8 %v940
    %v942 = vlaneseq
    %v943 = vshrl.u32 %v942, 7
    %v944 = vsub.s32 %v941, %v943
    %v945 = vrot.slane %v937, %v944
    %v947 = vunpack.c.l.s4 1934713408
    %v948 = vunpack.c.0.s8 %v947
    %v949 = vlaneseq
    %v950 = vshrl.u32 %v949, 7
    %v951 = vsub.s32 %v948, %v950
    %v952 = vrot.slane %v938, %v951
    %v953 = vcombine.low %v920, %v936
    %v954 = vcombine.high %v920, %v936
    %v956 = vunpack.c.l.s4 1934713408
    %v957 = vunpack.c.0.s8 %v956
    %v958 = vlaneseq
    %v959 = vshrl.u32 %v958, 7
    %v960 = vsub.s32 %v957, %v959
    %v961 = vrot.slane %v953, %v960
    %v963 = vunpack.c.l.s4 1934713408
    %v964 = vunpack.c.0.s8 %v963
    %v965 = vlaneseq
    %v966 = vshrl.u32 %v965, 7
    %v967 = vsub.s32 %v964, %v966
    %v968 = vrot.slane %v954, %v967
    %v969 = vcombine.high %v945, 0.0
    %v970 = vcombine.high %v952, 0.0
    %v971 = vcombine.high %v961, 0.0
    %v972 = vcombine.high %v968, 0.0
    %v973 = vcombine.low %v280, %v896
    %v974 = vcombine.high %v280, %v896
    %v976 = vunpack.c.l.s4 1983009808
    %v977 = vunpack.c.0.s8 %v976
    %v978 = vlaneseq
    %v979 = vshrl.u32 %v978, 7
    %v980 = vsub.s32 %v977, %v979
    %v981 = vrot.slane %v973, %v980
    %v983 = vunpack.c.l.s4 1983009808
    %v984 = vunpack.c.0.s8 %v983
    %v985 = vlaneseq
    %v986 = vshrl.u32 %v985, 7
    %v987 = vsub.s32 %v984, %v986
    %v988 = vrot.slane %v974, %v987
    %v989 = vcombine.low %v890, %v902
    %v990 = vcombine.high %v890, %v902
    %v992 = vunpack.c.l.s4 1983009808
    %v993 = vunpack.c.0.s8 %v992
    %v994 = vlaneseq
    %v995 = vshrl.u32 %v994, 7
    %v996 = vsub.s32 %v993, %v995
    %v997 = vrot.slane %v989, %v996
    %v999 = vunpack.c.l.s4 1983009808
    %v1000 = vunpack.c.0.s8 %v999
    %v1001 = vlaneseq
    %v1002 = vshrl.u32 %v1001, 7
    %v1003 = vsub.s32 %v1000, %v1002
    %v1004 = vrot.slane %v990, %v1003
    %v1005 = vcombine.low %v981, %v997
    %v1006 = vcombine.high %v981, %v997
    %v1008 = vunpack.c.l.s4 1934713408
    %v1009 = vunpack.c.0.s8 %v1008
    %v1010 = vlaneseq
    %v1011 = vshrl.u32 %v1010, 7
    %v1012 = vsub.s32 %v1009, %v1011
    %v1013 = vrot.slane %v1005, %v1012
    %v1015 = vunpack.c.l.s4 1934713408
    %v1016 = vunpack.c.0.s8 %v1015
    %v1017 = vlaneseq
    %v1018 = vshrl.u32 %v1017, 7
    %v1019 = vsub.s32 %v1016, %v1018
    %v1020 = vrot.slane %v1006, %v1019
    %v1021 = vcombine.low %v988, %v1004
    %v1022 = vcombine.high %v988, %v1004
    %v1024 = vunpack.c.l.s4 1934713408
    %v1025 = vunpack.c.0.s8 %v1024
    %v1026 = vlaneseq
    %v1027 = vshrl.u32 %v1026, 7
    %v1028 = vsub.s32 %v1025, %v1027
    %v1029 = vrot.slane %v1021, %v1028
    %v1031 = vunpack.c.l.s4 1934713408
    %v1032 = vunpack.c.0.s8 %v1031
    %v1033 = vlaneseq
    %v1034 = vshrl.u32 %v1033, 7
    %v1035 = vsub.s32 %v1032, %v1034
    %v1036 = vrot.slane %v1022, %v1035
    %v1037 = vcombine.high %v1013, 0.0
    %v1038 = vcombine.high %v1020, 0.0
    %v1039 = vcombine.high %v1029, 0.0
    %v1040 = vcombine.high %v1036, 0.0
    %v1041 = vcombine.low %v945, %v952
    %v1043 = vunpack.c.l.s4 1983009808
    %v1044 = vunpack.c.0.s8 %v1043
    %v1045 = vlaneseq
    %v1046 = vshrl.u32 %v1045, 7
    %v1047 = vsub.s32 %v1044, %v1046
    %v1048 = vrot.slane %v1041, %v1047
    %v1049 = vcombine.low %v969, %v970
    %v1051 = vunpack.c.l.s4 1983009808
    %v1052 = vunpack.c.0.s8 %v1051
    %v1053 = vlaneseq
    %v1054 = vshrl.u32 %v1053, 7
    %v1055 = vsub.s32 %v1052, %v1054
    %v1056 = vrot.slane %v1049, %v1055
    %v1057 = vcombine.low %v961, %v968
    %v1059 = vunpack.c.l.s4 1983009808
    %v1060 = vunpack.c.0.s8 %v1059
    %v1061 = vlaneseq
    %v1062 = vshrl.u32 %v1061, 7
    %v1063 = vsub.s32 %v1060, %v1062
    %v1064 = vrot.slane %v1057, %v1063
    %v1065 = vcombine.low %v971, %v972
    %v1067 = vunpack.c.l.s4 1983009808
    %v1068 = vunpack.c.0.s8 %v1067
    %v1069 = vlaneseq
    %v1070 = vshrl.u32 %v1069, 7
    %v1071 = vsub.s32 %v1068, %v1070
    %v1072 = vrot.slane %v1065, %v1071
    %v1073 = vcombine.low %v1048, %v1056
    %v1074 = vcombine.high %v1048, %v1056
    %v1076 = vunpack.c.l.s4 1934713408
    %v1077 = vunpack.c.0.s8 %v1076
    %v1078 = vlaneseq
    %v1079 = vshrl.u32 %v1078, 7
    %v1080 = vsub.s32 %v1077, %v1079
    %v1081 = vrot.slane %v1073, %v1080
    %v1083 = vunpack.c.l.s4 1934713408
    %v1084 = vunpack.c.0.s8 %v1083
    %v1085 = vlaneseq
    %v1086 = vshrl.u32 %v1085, 7
    %v1087 = vsub.s32 %v1084, %v1086
    %v1088 = vrot.slane %v1074, %v1087
    %v1089 = vcombine.low %v1064, %v1072
    %v1090 = vcombine.high %v1064, %v1072
    %v1092 = vunpack.c.l.s4 1934713408
    %v1093 = vunpack.c.0.s8 %v1092
    %v1094 = vlaneseq
    %v1095 = vshrl.u32 %v1094, 7
    %v1096 = vsub.s32 %v1093, %v1095
    %v1097 = vrot.slane %v1089, %v1096
    %v1099 = vunpack.c.l.s4 1934713408
    %v1100 = vunpack.c.0.s8 %v1099
    %v1101 = vlaneseq
    %v1102 = vshrl.u32 %v1101, 7
    %v1103 = vsub.s32 %v1100, %v1102
    %v1104 = vrot.slane %v1090, %v1103
    %v1105 = vcombine.low %v1081, %v1097
    %v1106 = vcombine.high %v1081, %v1097
    %v1107 = vcombine.low %v1088, %v1104
    %v1108 = vcombine.high %v1088, %v1104
    %v1109 = vcombine.low %v1013, %v1020
    %v1111 = vunpack.c.l.s4 1983009808
    %v1112 = vunpack.c.0.s8 %v1111
    %v1113 = vlaneseq
    %v1114 = vshrl.u32 %v1113, 7
    %v1115 = vsub.s32 %v1112, %v1114
    %v1116 = vrot.slane %v1109, %v1115
    %v1117 = vcombine.low %v1037, %v1038
    %v1119 = vunpack.c.l.s4 1983009808
    %v1120 = vunpack.c.0.s8 %v1119
    %v1121 = vlaneseq
    %v1122 = vshrl.u32 %v1121, 7
    %v1123 = vsub.s32 %v1120, %v1122
    %v1124 = vrot.slane %v1117, %v1123
    %v1125 = vcombine.low %v1029, %v1036
    %v1127 = vunpack.c.l.s4 1983009808
    %v1128 = vunpack.c.0.s8 %v1127
    %v1129 = vlaneseq
    %v1130 = vshrl.u32 %v1129, 7
    %v1131 = vsub.s32 %v1128, %v1130
    %v1132 = vrot.slane %v1125, %v1131
    %v1133 = vcombine.low %v1039, %v1040
    %v1135 = vunpack.c.l.s4 1983009808
    %v1136 = vunpack.c.0.s8 %v1135
    %v1137 = vlaneseq
    %v1138 = vshrl.u32 %v1137, 7
    %v1139 = vsub.s32 %v1136, %v1138
    %v1140 = vrot.slane %v1133, %v1139
    %v1141 = vcombine.low %v1116, %v1124
    %v1142 = vcombine.high %v1116, %v1124
    %v1144 = vunpack.c.l.s4 1934713408
    %v1145 = vunpack.c.0.s8 %v1144
    %v1146 = vlaneseq
    %v1147 = vshrl.u32 %v1146, 7
    %v1148 = vsub.s32 %v1145, %v1147
    %v1149 = vrot.slane %v1141, %v1148
    %v1151 = vunpack.c.l.s4 1934713408
    %v1152 = vunpack.c.0.s8 %v1151
    %v1153 = vlaneseq
    %v1154 = vshrl.u32 %v1153, 7
    %v1155 = vsub.s32 %v1152, %v1154
    %v1156 = vrot.slane %v1142, %v1155
    %v1157 = vcombine.low %v1132, %v1140
    %v1158 = vcombine.high %v1132, %v1140
    %v1160 = vunpack.c.l.s4 1934713408
    %v1161 = vunpack.c.0.s8 %v1160
    %v1162 = vlaneseq
    %v1163 = vshrl.u32 %v1162, 7
    %v1164 = vsub.s32 %v1161, %v1163
    %v1165 = vrot.slane %v1157, %v1164
    %v1167 = vunpack.c.l.s4 1934713408
    %v1168 = vunpack.c.0.s8 %v1167
    %v1169 = vlaneseq
    %v1170 = vshrl.u32 %v1169, 7
    %v1171 = vsub.s32 %v1168, %v1170
    %v1172 = vrot.slane %v1158, %v1171
    %v1173 = vcombine.low %v1149, %v1165
    %v1174 = vcombine.high %v1149, %v1165
    %v1175 = vcombine.low %v1156, %v1172
    %v1176 = vcombine.high %v1156, %v1172
    %v1177 = vld [vmem:[%s2] sm:$0xff]
    %v1178 = vld [vmem:[%s2 + $0x8] sm:$0xff]
    %vm1179 = vcmask 64512
    %v1181 = vsel %vm1179, %v503, 0
    %v1184 = vsel %vm1179, %v571, 0
    %v1187 = vsel %vm1179, %v813, 0
    %v1190 = vsel %vm1179, %v881, 0
    %1192 = vmatprep.subr.mxu0 0.0
    %1193 = vmatpush1.xpose.msra.mxu0 %v1187
    %1194 = vmatprep.subr.mxu0 0.0
    %1195 = vmatpush1.xpose.msra.mxu0 %v1190
    %1196 = vmatprep.subr.mxu0 0.0
    %1197 = vmatpush1.xpose.msra.mxu0 0.0
    %1198 = vmatprep.subr.mxu0 0.0
    %1199 = vmatpush1.xpose.msra.mxu0 0.0
    %1200 = vmatprep.subr.mxu0 0.0
    %1201 = vmatpush1.xpose.msra.mxu0 0.0
    %1202 = vmatprep.subr.mxu0 0.0
    %1203 = vmatpush1.xpose.msra.mxu0 0.0
    %1204 = vmatprep.subr.mxu0 0.0
    %1205 = vmatpush1.xpose.msra.mxu0 0.0
    %1206 = vmatprep.subr.mxu0 0.0
    %1207 = vmatpush1.xpose.msra.mxu0 0.0
    %1208 = vmatprep.subr.mxu0 0.0
    %1209 = vmatpush1.xpose.msra.mxu0 0.0
    %1210 = vmatprep.subr.mxu0 0.0
    %1211 = vmatpush1.xpose.msra.mxu0 0.0
    %1212 = vmatprep.subr.mxu0 0.0
    %1213 = vmatpush1.xpose.msra.mxu0 0.0
    %1214 = vmatprep.subr.mxu0 0.0
    %1215 = vmatpush1.xpose.msra.mxu0 0.0
    %1216 = vmatprep.subr.mxu0 0.0
    %1217 = vmatpush1.xpose.msra.mxu0 0.0
    %1218 = vmatprep.subr.mxu0 0.0
    %1219 = vmatpush1.xpose.msra.mxu0 0.0
    %1220 = vmatprep.subr.mxu0 0.0
    %1221 = vmatpush1.xpose.msra.mxu0 0.0
    %1222 = vmatprep.subr.mxu0 0.0
    %1223 = vmatpush1.xpose.msra.mxu0 0.0
    %1224 = vmatprep.subr.mxu0 0.0
    %1225 = vmatpush1.xpose.msra.mxu0 0.0
    %1226 = vmatprep.subr.mxu0 0.0
    %1227 = vmatpush1.xpose.msra.mxu0 0.0
    %1228 = vmatprep.subr.mxu0 0.0
    %1229 = vmatpush1.xpose.msra.mxu0 0.0
    %1230 = vmatprep.subr.mxu0 0.0
    %1231 = vmatpush1.xpose.msra.mxu0 0.0
    %1232 = vmatprep.subr.mxu0 0.0
    %1233 = vmatpush1.xpose.msra.mxu0 0.0
    %1234 = vmatprep.subr.mxu0 0.0
    %1235 = vmatpush1.xpose.msra.mxu0 0.0
    %1236 = vmatprep.subr.mxu0 0.0
    %1237 = vmatpush1.xpose.msra.mxu0 0.0
    %1238 = vmatprep.subr.mxu0 0.0
    %1239 = vmatpush1.xpose.msra.mxu0 0.0
    %1240 = vmatprep.subr.mxu0 0.0
    %1241 = vmatpush1.xpose.msra.mxu0 0.0
    %1242 = vmatprep.subr.mxu0 0.0
    %1243 = vmatpush1.xpose.msra.mxu0 0.0
    %1244 = vmatprep.subr.mxu0 0.0
    %1245 = vmatpush1.xpose.msra.mxu0 0.0
    %1246 = vmatprep.subr.mxu0 0.0
    %1247 = vmatpush1.xpose.msra.mxu0 0.0
    %1248 = vmatprep.subr.mxu0 0.0
    %1249 = vmatpush1.xpose.msra.mxu0 0.0
    %1250 = vmatprep.subr.mxu0 0.0
    %1251 = vmatpush1.xpose.msra.mxu0 0.0
    %1252 = vmatprep.subr.mxu0 0.0
    %1253 = vmatpush1.xpose.msra.mxu0 0.0
    %1254 = vmatprep.subr.mxu0 0.0
    %1255 = vmatpush1.xpose.msra.mxu0 0.0
    %1256 = vmatprep.mubr.f32.mxu0 0.0
    %1257 = vmatmul.mubr.f32.gmra.mrb[0].mxu0 %v1181
    %v1258 = vpop.f32.mrb[0].mxu0
    %v1259 = vadd.f32 %v1177, %v1258
    %v1260 = vpop.f32.mrb[0].mxu0
    %1261 = vmatprep.mubr.f32.mxu0 0.0
    %1262 = vmatmul.mubr.f32.gmra.mrb[0].mxu0 %v1184
    %v1263 = vpop.f32.mrb[0].mxu0
    %v1264 = vadd.f32 %v1178, %v1263
    %v1265 = vpop.f32.mrb[0].mxu0
    %1266 = vdwg.mxu0
    %v1268 = vsel %vm1179, %v504, 0
    %v1271 = vsel %vm1179, %v572, 0
    %v1274 = vsel %vm1179, %v814, 0
    %v1277 = vsel %vm1179, %v882, 0
    %1279 = vmatprep.subr.mxu0 0.0
    %1280 = vmatpush1.xpose.msra.mxu0 %v1274
    %1281 = vmatprep.subr.mxu0 0.0
    %1282 = vmatpush1.xpose.msra.mxu0 %v1277
    %1283 = vmatprep.subr.mxu0 0.0
    %1284 = vmatpush1.xpose.msra.mxu0 0.0
    %1285 = vmatprep.subr.mxu0 0.0
    %1286 = vmatpush1.xpose.msra.mxu0 0.0
    %1287 = vmatprep.subr.mxu0 0.0
    %1288 = vmatpush1.xpose.msra.mxu0 0.0
    %1289 = vmatprep.subr.mxu0 0.0
    %1290 = vmatpush1.xpose.msra.mxu0 0.0
    %1291 = vmatprep.subr.mxu0 0.0
    %1292 = vmatpush1.xpose.msra.mxu0 0.0
    %1293 = vmatprep.subr.mxu0 0.0
    %1294 = vmatpush1.xpose.msra.mxu0 0.0
    %1295 = vmatprep.subr.mxu0 0.0
    %1296 = vmatpush1.xpose.msra.mxu0 0.0
    %1297 = vmatprep.subr.mxu0 0.0
    %1298 = vmatpush1.xpose.msra.mxu0 0.0
    %1299 = vmatprep.subr.mxu0 0.0
    %1300 = vmatpush1.xpose.msra.mxu0 0.0
    %1301 = vmatprep.subr.mxu0 0.0
    %1302 = vmatpush1.xpose.msra.mxu0 0.0
    %1303 = vmatprep.subr.mxu0 0.0
    %1304 = vmatpush1.xpose.msra.mxu0 0.0
    %1305 = vmatprep.subr.mxu0 0.0
    %1306 = vmatpush1.xpose.msra.mxu0 0.0
    %1307 = vmatprep.subr.mxu0 0.0
    %1308 = vmatpush1.xpose.msra.mxu0 0.0
    %1309 = vmatprep.subr.mxu0 0.0
    %1310 = vmatpush1.xpose.msra.mxu0 0.0
    %1311 = vmatprep.subr.mxu0 0.0
    %1312 = vmatpush1.xpose.msra.mxu0 0.0
    %1313 = vmatprep.subr.mxu0 0.0
    %1314 = vmatpush1.xpose.msra.mxu0 0.0
    %1315 = vmatprep.subr.mxu0 0.0
    %1316 = vmatpush1.xpose.msra.mxu0 0.0
    %1317 = vmatprep.subr.mxu0 0.0
    %1318 = vmatpush1.xpose.msra.mxu0 0.0
    %1319 = vmatprep.subr.mxu0 0.0
    %1320 = vmatpush1.xpose.msra.mxu0 0.0
    %1321 = vmatprep.subr.mxu0 0.0
    %1322 = vmatpush1.xpose.msra.mxu0 0.0
    %1323 = vmatprep.subr.mxu0 0.0
    %1324 = vmatpush1.xpose.msra.mxu0 0.0
    %1325 = vmatprep.subr.mxu0 0.0
    %1326 = vmatpush1.xpose.msra.mxu0 0.0
    %1327 = vmatprep.subr.mxu0 0.0
    %1328 = vmatpush1.xpose.msra.mxu0 0.0
    %1329 = vmatprep.subr.mxu0 0.0
    %1330 = vmatpush1.xpose.msra.mxu0 0.0
    %1331 = vmatprep.subr.mxu0 0.0
    %1332 = vmatpush1.xpose.msra.mxu0 0.0
    %1333 = vmatprep.subr.mxu0 0.0
    %1334 = vmatpush1.xpose.msra.mxu0 0.0
    %1335 = vmatprep.subr.mxu0 0.0
    %1336 = vmatpush1.xpose.msra.mxu0 0.0
    %1337 = vmatprep.subr.mxu0 0.0
    %1338 = vmatpush1.xpose.msra.mxu0 0.0
    %1339 = vmatprep.subr.mxu0 0.0
    %1340 = vmatpush1.xpose.msra.mxu0 0.0
    %1341 = vmatprep.subr.mxu0 0.0
    %1342 = vmatpush1.xpose.msra.mxu0 0.0
    %1343 = vmatprep.mubr.f32.mxu0 0.0
    %1344 = vmatmul.mubr.f32.gmra.mrb[0].mxu0 %v1268
    %v1345 = vpop.f32.mrb[0].mxu0
    %v1346 = vadd.f32 %v1177, %v1345
    %v1347 = vpop.f32.mrb[0].mxu0
    %1348 = vmatprep.mubr.f32.mxu0 0.0
    %1349 = vmatmul.mubr.f32.gmra.mrb[0].mxu0 %v1271
    %v1350 = vpop.f32.mrb[0].mxu0
    %v1351 = vadd.f32 %v1178, %v1350
    %v1352 = vpop.f32.mrb[0].mxu0
    %1353 = vdwg.mxu0
    %v1355 = vsel %vm1179, %v505, 0
    %v1358 = vsel %vm1179, %v573, 0
    %v1361 = vsel %vm1179, %v815, 0
    %v1364 = vsel %vm1179, %v883, 0
    %1366 = vmatprep.subr.mxu0 0.0
    %1367 = vmatpush1.xpose.msra.mxu0 %v1361
    %1368 = vmatprep.subr.mxu0 0.0
    %1369 = vmatpush1.xpose.msra.mxu0 %v1364
    %1370 = vmatprep.subr.mxu0 0.0
    %1371 = vmatpush1.xpose.msra.mxu0 0.0
    %1372 = vmatprep.subr.mxu0 0.0
    %1373 = vmatpush1.xpose.msra.mxu0 0.0
    %1374 = vmatprep.subr.mxu0 0.0
    %1375 = vmatpush1.xpose.msra.mxu0 0.0
    %1376 = vmatprep.subr.mxu0 0.0
    %1377 = vmatpush1.xpose.msra.mxu0 0.0
    %1378 = vmatprep.subr.mxu0 0.0
    %1379 = vmatpush1.xpose.msra.mxu0 0.0
    %1380 = vmatprep.subr.mxu0 0.0
    %1381 = vmatpush1.xpose.msra.mxu0 0.0
    %1382 = vmatprep.subr.mxu0 0.0
    %1383 = vmatpush1.xpose.msra.mxu0 0.0
    %1384 = vmatprep.subr.mxu0 0.0
    %1385 = vmatpush1.xpose.msra.mxu0 0.0
    %1386 = vmatprep.subr.mxu0 0.0
    %1387 = vmatpush1.xpose.msra.mxu0 0.0
    %1388 = vmatprep.subr.mxu0 0.0
    %1389 = vmatpush1.xpose.msra.mxu0 0.0
    %1390 = vmatprep.subr.mxu0 0.0
    %1391 = vmatpush1.xpose.msra.mxu0 0.0
    %1392 = vmatprep.subr.mxu0 0.0
    %1393 = vmatpush1.xpose.msra.mxu0 0.0
    %1394 = vmatprep.subr.mxu0 0.0
    %1395 = vmatpush1.xpose.msra.mxu0 0.0
    %1396 = vmatprep.subr.mxu0 0.0
    %1397 = vmatpush1.xpose.msra.mxu0 0.0
    %1398 = vmatprep.subr.mxu0 0.0
    %1399 = vmatpush1.xpose.msra.mxu0 0.0
    %1400 = vmatprep.subr.mxu0 0.0
    %1401 = vmatpush1.xpose.msra.mxu0 0.0
    %1402 = vmatprep.subr.mxu0 0.0
    %1403 = vmatpush1.xpose.msra.mxu0 0.0
    %1404 = vmatprep.subr.mxu0 0.0
    %1405 = vmatpush1.xpose.msra.mxu0 0.0
    %1406 = vmatprep.subr.mxu0 0.0
    %1407 = vmatpush1.xpose.msra.mxu0 0.0
    %1408 = vmatprep.subr.mxu0 0.0
    %1409 = vmatpush1.xpose.msra.mxu0 0.0
    %1410 = vmatprep.subr.mxu0 0.0
    %1411 = vmatpush1.xpose.msra.mxu0 0.0
    %1412 = vmatprep.subr.mxu0 0.0
    %1413 = vmatpush1.xpose.msra.mxu0 0.0
    %1414 = vmatprep.subr.mxu0 0.0
    %1415 = vmatpush1.xpose.msra.mxu0 0.0
    %1416 = vmatprep.subr.mxu0 0.0
    %1417 = vmatpush1.xpose.msra.mxu0 0.0
    %1418 = vmatprep.subr.mxu0 0.0
    %1419 = vmatpush1.xpose.msra.mxu0 0.0
    %1420 = vmatprep.subr.mxu0 0.0
    %1421 = vmatpush1.xpose.msra.mxu0 0.0
    %1422 = vmatprep.subr.mxu0 0.0
    %1423 = vmatpush1.xpose.msra.mxu0 0.0
    %1424 = vmatprep.subr.mxu0 0.0
    %1425 = vmatpush1.xpose.msra.mxu0 0.0
    %1426 = vmatprep.subr.mxu0 0.0
    %1427 = vmatpush1.xpose.msra.mxu0 0.0
    %1428 = vmatprep.subr.mxu0 0.0
    %1429 = vmatpush1.xpose.msra.mxu0 0.0
    %1430 = vmatprep.mubr.f32.mxu0 0.0
    %1431 = vmatmul.mubr.f32.gmra.mrb[0].mxu0 %v1355
    %v1432 = vpop.f32.mrb[0].mxu0
    %v1433 = vadd.f32 %v1177, %v1432
    %v1434 = vpop.f32.mrb[0].mxu0
    %1435 = vmatprep.mubr.f32.mxu0 0.0
    %1436 = vmatmul.mubr.f32.gmra.mrb[0].mxu0 %v1358
    %v1437 = vpop.f32.mrb[0].mxu0
    %v1438 = vadd.f32 %v1178, %v1437
    %v1439 = vpop.f32.mrb[0].mxu0
    %1440 = vdwg.mxu0
    %v1442 = vsel %vm1179, %v506, 0
    %v1445 = vsel %vm1179, %v574, 0
    %v1448 = vsel %vm1179, %v816, 0
    %v1451 = vsel %vm1179, %v884, 0
    %1453 = vmatprep.subr.mxu0 0.0
    %1454 = vmatpush1.xpose.msra.mxu0 %v1448
    %1455 = vmatprep.subr.mxu0 0.0
    %1456 = vmatpush1.xpose.msra.mxu0 %v1451
    %1457 = vmatprep.subr.mxu0 0.0
    %1458 = vmatpush1.xpose.msra.mxu0 0.0
    %1459 = vmatprep.subr.mxu0 0.0
    %1460 = vmatpush1.xpose.msra.mxu0 0.0
    %1461 = vmatprep.subr.mxu0 0.0
    %1462 = vmatpush1.xpose.msra.mxu0 0.0
    %1463 = vmatprep.subr.mxu0 0.0
    %1464 = vmatpush1.xpose.msra.mxu0 0.0
    %1465 = vmatprep.subr.mxu0 0.0
    %1466 = vmatpush1.xpose.msra.mxu0 0.0
    %1467 = vmatprep.subr.mxu0 0.0
    %1468 = vmatpush1.xpose.msra.mxu0 0.0
    %1469 = vmatprep.subr.mxu0 0.0
    %1470 = vmatpush1.xpose.msra.mxu0 0.0
    %1471 = vmatprep.subr.mxu0 0.0
    %1472 = vmatpush1.xpose.msra.mxu0 0.0
    %1473 = vmatprep.subr.mxu0 0.0
    %1474 = vmatpush1.xpose.msra.mxu0 0.0
    %1475 = vmatprep.subr.mxu0 0.0
    %1476 = vmatpush1.xpose.msra.mxu0 0.0
    %1477 = vmatprep.subr.mxu0 0.0
    %1478 = vmatpush1.xpose.msra.mxu0 0.0
    %1479 = vmatprep.subr.mxu0 0.0
    %1480 = vmatpush1.xpose.msra.mxu0 0.0
    %1481 = vmatprep.subr.mxu0 0.0
    %1482 = vmatpush1.xpose.msra.mxu0 0.0
    %1483 = vmatprep.subr.mxu0 0.0
    %1484 = vmatpush1.xpose.msra.mxu0 0.0
    %1485 = vmatprep.subr.mxu0 0.0
    %1486 = vmatpush1.xpose.msra.mxu0 0.0
    %1487 = vmatprep.subr.mxu0 0.0
    %1488 = vmatpush1.xpose.msra.mxu0 0.0
    %1489 = vmatprep.subr.mxu0 0.0
    %1490 = vmatpush1.xpose.msra.mxu0 0.0
    %1491 = vmatprep.subr.mxu0 0.0
    %1492 = vmatpush1.xpose.msra.mxu0 0.0
    %1493 = vmatprep.subr.mxu0 0.0
    %1494 = vmatpush1.xpose.msra.mxu0 0.0
    %1495 = vmatprep.subr.mxu0 0.0
    %1496 = vmatpush1.xpose.msra.mxu0 0.0
    %1497 = vmatprep.subr.mxu0 0.0
    %1498 = vmatpush1.xpose.msra.mxu0 0.0
    %1499 = vmatprep.subr.mxu0 0.0
    %1500 = vmatpush1.xpose.msra.mxu0 0.0
    %1501 = vmatprep.subr.mxu0 0.0
    %1502 = vmatpush1.xpose.msra.mxu0 0.0
    %1503 = vmatprep.subr.mxu0 0.0
    %1504 = vmatpush1.xpose.msra.mxu0 0.0
    %1505 = vmatprep.subr.mxu0 0.0
    %1506 = vmatpush1.xpose.msra.mxu0 0.0
    %1507 = vmatprep.subr.mxu0 0.0
    %1508 = vmatpush1.xpose.msra.mxu0 0.0
    %1509 = vmatprep.subr.mxu0 0.0
    %1510 = vmatpush1.xpose.msra.mxu0 0.0
    %1511 = vmatprep.subr.mxu0 0.0
    %1512 = vmatpush1.xpose.msra.mxu0 0.0
    %1513 = vmatprep.subr.mxu0 0.0
    %1514 = vmatpush1.xpose.msra.mxu0 0.0
    %1515 = vmatprep.subr.mxu0 0.0
    %1516 = vmatpush1.xpose.msra.mxu0 0.0
    %1517 = vmatprep.mubr.f32.mxu0 0.0
    %1518 = vmatmul.mubr.f32.gmra.mrb[0].mxu0 %v1442
    %v1519 = vpop.f32.mrb[0].mxu0
    %v1520 = vadd.f32 %v1177, %v1519
    %v1521 = vpop.f32.mrb[0].mxu0
    %1522 = vmatprep.mubr.f32.mxu0 0.0
    %1523 = vmatmul.mubr.f32.gmra.mrb[0].mxu0 %v1445
    %v1524 = vpop.f32.mrb[0].mxu0
    %v1525 = vadd.f32 %v1178, %v1524
    %v1526 = vpop.f32.mrb[0].mxu0
    %1527 = vdwg.mxu0
    %vm1528 = vcmask 130048
    %v1529 = vsel %vm1528, %v1259, -inf
    %1530 = vmax.xlane.f32.xlu0 %v1529
    %v1531 = vpop.xlane.xlu0 %1530
    %v1532 = vsel %vm1528, %v1264, -inf
    %1533 = vmax.xlane.f32.xlu0 %v1532
    %v1534 = vpop.xlane.xlu0 %1533
    %v1535 = vsel %vm1528, %v1346, -inf
    %1536 = vmax.xlane.f32.xlu0 %v1535
    %v1537 = vpop.xlane.xlu0 %1536
    %v1538 = vsel %vm1528, %v1351, -inf
    %1539 = vmax.xlane.f32.xlu0 %v1538
    %v1540 = vpop.xlane.xlu0 %1539
    %v1541 = vsel %vm1528, %v1433, -inf
    %1542 = vmax.xlane.f32.xlu0 %v1541
    %v1543 = vpop.xlane.xlu0 %1542
    %v1544 = vsel %vm1528, %v1438, -inf
    %1545 = vmax.xlane.f32.xlu0 %v1544
    %v1546 = vpop.xlane.xlu0 %1545
    %v1547 = vsel %vm1528, %v1520, -inf
    %1548 = vmax.xlane.f32.xlu0 %v1547
    %v1549 = vpop.xlane.xlu0 %1548
    %v1550 = vsel %vm1528, %v1525, -inf
    %1551 = vmax.xlane.f32.xlu0 %v1550
    %v1552 = vpop.xlane.xlu0 %1551
    %v1553 = vsub.f32 %v1259, %v1531
    %v1554 = vsub.f32 %v1264, %v1534
    %v1555 = vsub.f32 %v1346, %v1537
    %v1556 = vsub.f32 %v1351, %v1540
    %v1557 = vsub.f32 %v1433, %v1543
    %v1558 = vsub.f32 %v1438, %v1546
    %v1559 = vsub.f32 %v1520, %v1549
    %v1560 = vsub.f32 %v1525, %v1552
    %v1561 = vmul.f32 %v1553, 1.442695
    %v1562 = vpow.pop %v1561
    %v1563 = vmul.f32 %v1554, 1.442695
    %v1564 = vpow.pop %v1563
    %v1565 = vmul.f32 %v1555, 1.442695
    %v1566 = vpow.pop %v1565
    %v1567 = vmul.f32 %v1556, 1.442695
    %v1568 = vpow.pop %v1567
    %v1569 = vmul.f32 %v1557, 1.442695
    %v1570 = vpow.pop %v1569
    %v1571 = vmul.f32 %v1558, 1.442695
    %v1572 = vpow.pop %v1571
    %v1573 = vmul.f32 %v1559, 1.442695
    %v1574 = vpow.pop %v1573
    %v1575 = vmul.f32 %v1560, 1.442695
    %v1576 = vpow.pop %v1575
    %v1577 = vsel %vm1528, %v1562, 0.0
    %1578 = vadd.xlane.f32.xlu0 %v1577
    %v1579 = vpop.xlane.xlu0 %1578
    %v1580 = vsel %vm1528, %v1564, 0.0
    %1581 = vadd.xlane.f32.xlu0 %v1580
    %v1582 = vpop.xlane.xlu0 %1581
    %v1583 = vsel %vm1528, %v1566, 0.0
    %1584 = vadd.xlane.f32.xlu0 %v1583
    %v1585 = vpop.xlane.xlu0 %1584
    %v1586 = vsel %vm1528, %v1568, 0.0
    %1587 = vadd.xlane.f32.xlu0 %v1586
    %v1588 = vpop.xlane.xlu0 %1587
    %v1589 = vsel %vm1528, %v1570, 0.0
    %1590 = vadd.xlane.f32.xlu0 %v1589
    %v1591 = vpop.xlane.xlu0 %1590
    %v1592 = vsel %vm1528, %v1572, 0.0
    %1593 = vadd.xlane.f32.xlu0 %v1592
    %v1594 = vpop.xlane.xlu0 %1593
    %v1595 = vsel %vm1528, %v1574, 0.0
    %1596 = vadd.xlane.f32.xlu0 %v1595
    %v1597 = vpop.xlane.xlu0 %1596
    %v1598 = vsel %vm1528, %v1576, 0.0
    %1599 = vadd.xlane.f32.xlu0 %v1598
    %v1600 = vpop.xlane.xlu0 %1599
    %v1601 = vrcp.pop %v1579
    %v1602 = vrcp.pop %v1582
    %v1603 = vrcp.pop %v1585
    %v1604 = vrcp.pop %v1588
    %v1605 = vrcp.pop %v1591
    %v1606 = vrcp.pop %v1594
    %v1607 = vrcp.pop %v1597
    %v1608 = vrcp.pop %v1600
    %v1609 = vmul.f32 %v1562, %v1601
    %v1610 = vmul.f32 %v1564, %v1602
    %v1611 = vmul.f32 %v1566, %v1603
    %v1612 = vmul.f32 %v1568, %v1604
    %v1613 = vmul.f32 %v1570, %v1605
    %v1614 = vmul.f32 %v1572, %v1606
    %v1615 = vmul.f32 %v1574, %v1607
    %v1616 = vmul.f32 %v1576, %v1608
    %v1618 = vsel %vm1528, %v1609, 0
    %v1621 = vsel %vm1528, %v1610, 0
    %1623 = vmatprep.subr.mxu0 0.0
    %1624 = vmatpush1.msra.mxu0 %v1105
    %1625 = vmatprep.subr.mxu0 0.0
    %1626 = vmatpush1.msra.mxu0 %v1173
    %1627 = vmatprep.subr.mxu0 0.0
    %1628 = vmatpush1.msra.mxu0 0.0
    %1629 = vmatprep.subr.mxu0 0.0
    %1630 = vmatpush1.msra.mxu0 0.0
    %1631 = vmatprep.subr.mxu0 0.0
    %1632 = vmatpush1.msra.mxu0 0.0
    %1633 = vmatprep.subr.mxu0 0.0
    %1634 = vmatpush1.msra.mxu0 0.0
    %1635 = vmatprep.subr.mxu0 0.0
    %1636 = vmatpush1.msra.mxu0 0.0
    %1637 = vmatprep.subr.mxu0 0.0
    %1638 = vmatpush1.msra.mxu0 0.0
    %1639 = vmatprep.subr.mxu0 0.0
    %1640 = vmatpush1.msra.mxu0 0.0
    %1641 = vmatprep.subr.mxu0 0.0
    %1642 = vmatpush1.msra.mxu0 0.0
    %1643 = vmatprep.subr.mxu0 0.0
    %1644 = vmatpush1.msra.mxu0 0.0
    %1645 = vmatprep.subr.mxu0 0.0
    %1646 = vmatpush1.msra.mxu0 0.0
    %1647 = vmatprep.subr.mxu0 0.0
    %1648 = vmatpush1.msra.mxu0 0.0
    %1649 = vmatprep.subr.mxu0 0.0
    %1650 = vmatpush1.msra.mxu0 0.0
    %1651 = vmatprep.subr.mxu0 0.0
    %1652 = vmatpush1.msra.mxu0 0.0
    %1653 = vmatprep.subr.mxu0 0.0
    %1654 = vmatpush1.msra.mxu0 0.0
    %1655 = vmatprep.subr.mxu0 0.0
    %1656 = vmatpush1.msra.mxu0 0.0
    %1657 = vmatprep.subr.mxu0 0.0
    %1658 = vmatpush1.msra.mxu0 0.0
    %1659 = vmatprep.subr.mxu0 0.0
    %1660 = vmatpush1.msra.mxu0 0.0
    %1661 = vmatprep.subr.mxu0 0.0
    %1662 = vmatpush1.msra.mxu0 0.0
    %1663 = vmatprep.subr.mxu0 0.0
    %1664 = vmatpush1.msra.mxu0 0.0
    %1665 = vmatprep.subr.mxu0 0.0
    %1666 = vmatpush1.msra.mxu0 0.0
    %1667 = vmatprep.subr.mxu0 0.0
    %1668 = vmatpush1.msra.mxu0 0.0
    %1669 = vmatprep.subr.mxu0 0.0
    %1670 = vmatpush1.msra.mxu0 0.0
    %1671 = vmatprep.subr.mxu0 0.0
    %1672 = vmatpush1.msra.mxu0 0.0
    %1673 = vmatprep.subr.mxu0 0.0
    %1674 = vmatpush1.msra.mxu0 0.0
    %1675 = vmatprep.subr.mxu0 0.0
    %1676 = vmatpush1.msra.mxu0 0.0
    %1677 = vmatprep.subr.mxu0 0.0
    %1678 = vmatpush1.msra.mxu0 0.0
    %1679 = vmatprep.subr.mxu0 0.0
    %1680 = vmatpush1.msra.mxu0 0.0
    %1681 = vmatprep.subr.mxu0 0.0
    %1682 = vmatpush1.msra.mxu0 0.0
    %1683 = vmatprep.subr.mxu0 0.0
    %1684 = vmatpush1.msra.mxu0 0.0
    %1685 = vmatprep.subr.mxu0 0.0
    %1686 = vmatpush1.msra.mxu0 0.0
    %1687 = vmatprep.mubr.f32.mxu0 0.0
    %1688 = vmatmul.mubr.f32.gmra.mrb[0].mxu0 %v1618
    %v1689 = vpop.f32.mrb[0].mxu0
    %v1690 = vadd.f32 0.0, %v1689
    %v1691 = vpop.f32.mrb[0].mxu0
    %1692 = vmatprep.mubr.f32.mxu0 0.0
    %1693 = vmatmul.mubr.f32.gmra.mrb[0].mxu0 %v1621
    %v1694 = vpop.f32.mrb[0].mxu0
    %v1695 = vadd.f32 0.0, %v1694
    %v1696 = vpop.f32.mrb[0].mxu0
    %1697 = vdwg.mxu0
    %v1699 = vsel %vm1528, %v1611, 0
    %v1702 = vsel %vm1528, %v1612, 0
    %1704 = vmatprep.subr.mxu0 0.0
    %1705 = vmatpush1.msra.mxu0 %v1106
    %1706 = vmatprep.subr.mxu0 0.0
    %1707 = vmatpush1.msra.mxu0 %v1174
    %1708 = vmatprep.subr.mxu0 0.0
    %1709 = vmatpush1.msra.mxu0 0.0
    %1710 = vmatprep.subr.mxu0 0.0
    %1711 = vmatpush1.msra.mxu0 0.0
    %1712 = vmatprep.subr.mxu0 0.0
    %1713 = vmatpush1.msra.mxu0 0.0
    %1714 = vmatprep.subr.mxu0 0.0
    %1715 = vmatpush1.msra.mxu0 0.0
    %1716 = vmatprep.subr.mxu0 0.0
    %1717 = vmatpush1.msra.mxu0 0.0
    %1718 = vmatprep.subr.mxu0 0.0
    %1719 = vmatpush1.msra.mxu0 0.0
    %1720 = vmatprep.subr.mxu0 0.0
    %1721 = vmatpush1.msra.mxu0 0.0
    %1722 = vmatprep.subr.mxu0 0.0
    %1723 = vmatpush1.msra.mxu0 0.0
    %1724 = vmatprep.subr.mxu0 0.0
    %1725 = vmatpush1.msra.mxu0 0.0
    %1726 = vmatprep.subr.mxu0 0.0
    %1727 = vmatpush1.msra.mxu0 0.0
    %1728 = vmatprep.subr.mxu0 0.0
    %1729 = vmatpush1.msra.mxu0 0.0
    %1730 = vmatprep.subr.mxu0 0.0
    %1731 = vmatpush1.msra.mxu0 0.0
    %1732 = vmatprep.subr.mxu0 0.0
    %1733 = vmatpush1.msra.mxu0 0.0
    %1734 = vmatprep.subr.mxu0 0.0
    %1735 = vmatpush1.msra.mxu0 0.0
    %1736 = vmatprep.subr.mxu0 0.0
    %1737 = vmatpush1.msra.mxu0 0.0
    %1738 = vmatprep.subr.mxu0 0.0
    %1739 = vmatpush1.msra.mxu0 0.0
    %1740 = vmatprep.subr.mxu0 0.0
    %1741 = vmatpush1.msra.mxu0 0.0
    %1742 = vmatprep.subr.mxu0 0.0
    %1743 = vmatpush1.msra.mxu0 0.0
    %1744 = vmatprep.subr.mxu0 0.0
    %1745 = vmatpush1.msra.mxu0 0.0
    %1746 = vmatprep.subr.mxu0 0.0
    %1747 = vmatpush1.msra.mxu0 0.0
    %1748 = vmatprep.subr.mxu0 0.0
    %1749 = vmatpush1.msra.mxu0 0.0
    %1750 = vmatprep.subr.mxu0 0.0
    %1751 = vmatpush1.msra.mxu0 0.0
    %1752 = vmatprep.subr.mxu0 0.0
    %1753 = vmatpush1.msra.mxu0 0.0
    %1754 = vmatprep.subr.mxu0 0.0
    %1755 = vmatpush1.msra.mxu0 0.0
    %1756 = vmatprep.subr.mxu0 0.0
    %1757 = vmatpush1.msra.mxu0 0.0
    %1758 = vmatprep.subr.mxu0 0.0
    %1759 = vmatpush1.msra.mxu0 0.0
    %1760 = vmatprep.subr.mxu0 0.0
    %1761 = vmatpush1.msra.mxu0 0.0
    %1762 = vmatprep.subr.mxu0 0.0
    %1763 = vmatpush1.msra.mxu0 0.0
    %1764 = vmatprep.subr.mxu0 0.0
    %1765 = vmatpush1.msra.mxu0 0.0
    %1766 = vmatprep.subr.mxu0 0.0
    %1767 = vmatpush1.msra.mxu0 0.0
    %1768 = vmatprep.mubr.f32.mxu0 0.0
    %1769 = vmatmul.mubr.f32.gmra.mrb[0].mxu0 %v1699
    %v1770 = vpop.f32.mrb[0].mxu0
    %v1771 = vadd.f32 0.0, %v1770
    %v1772 = vpop.f32.mrb[0].mxu0
    %1773 = vmatprep.mubr.f32.mxu0 0.0
    %1774 = vmatmul.mubr.f32.gmra.mrb[0].mxu0 %v1702
    %v1775 = vpop.f32.mrb[0].mxu0
    %v1776 = vadd.f32 0.0, %v1775
    %v1777 = vpop.f32.mrb[0].mxu0
    %1778 = vdwg.mxu0
    %v1780 = vsel %vm1528, %v1613, 0
    %v1783 = vsel %vm1528, %v1614, 0
    %1785 = vmatprep.subr.mxu0 0.0
    %1786 = vmatpush1.msra.mxu0 %v1107
    %1787 = vmatprep.subr.mxu0 0.0
    %1788 = vmatpush1.msra.mxu0 %v1175
    %1789 = vmatprep.subr.mxu0 0.0
    %1790 = vmatpush1.msra.mxu0 0.0
    %1791 = vmatprep.subr.mxu0 0.0
    %1792 = vmatpush1.msra.mxu0 0.0
    %1793 = vmatprep.subr.mxu0 0.0
    %1794 = vmatpush1.msra.mxu0 0.0
    %1795 = vmatprep.subr.mxu0 0.0
    %1796 = vmatpush1.msra.mxu0 0.0
    %1797 = vmatprep.subr.mxu0 0.0
    %1798 = vmatpush1.msra.mxu0 0.0
    %1799 = vmatprep.subr.mxu0 0.0
    %1800 = vmatpush1.msra.mxu0 0.0
    %1801 = vmatprep.subr.mxu0 0.0
    %1802 = vmatpush1.msra.mxu0 0.0
    %1803 = vmatprep.subr.mxu0 0.0
    %1804 = vmatpush1.msra.mxu0 0.0
    %1805 = vmatprep.subr.mxu0 0.0
    %1806 = vmatpush1.msra.mxu0 0.0
    %1807 = vmatprep.subr.mxu0 0.0
    %1808 = vmatpush1.msra.mxu0 0.0
    %1809 = vmatprep.subr.mxu0 0.0
    %1810 = vmatpush1.msra.mxu0 0.0
    %1811 = vmatprep.subr.mxu0 0.0
    %1812 = vmatpush1.msra.mxu0 0.0
    %1813 = vmatprep.subr.mxu0 0.0
    %1814 = vmatpush1.msra.mxu0 0.0
    %1815 = vmatprep.subr.mxu0 0.0
    %1816 = vmatpush1.msra.mxu0 0.0
    %1817 = vmatprep.subr.mxu0 0.0
    %1818 = vmatpush1.msra.mxu0 0.0
    %1819 = vmatprep.subr.mxu0 0.0
    %1820 = vmatpush1.msra.mxu0 0.0
    %1821 = vmatprep.subr.mxu0 0.0
    %1822 = vmatpush1.msra.mxu0 0.0
    %1823 = vmatprep.subr.mxu0 0.0
    %1824 = vmatpush1.msra.mxu0 0.0
    %1825 = vmatprep.subr.mxu0 0.0
    %1826 = vmatpush1.msra.mxu0 0.0
    %1827 = vmatprep.subr.mxu0 0.0
    %1828 = vmatpush1.msra.mxu0 0.0
    %1829 = vmatprep.subr.mxu0 0.0
    %1830 = vmatpush1.msra.mxu0 0.0
    %1831 = vmatprep.subr.mxu0 0.0
    %1832 = vmatpush1.msra.mxu0 0.0
    %1833 = vmatprep.subr.mxu0 0.0
    %1834 = vmatpush1.msra.mxu0 0.0
    %1835 = vmatprep.subr.mxu0 0.0
    %1836 = vmatpush1.msra.mxu0 0.0
    %1837 = vmatprep.subr.mxu0 0.0
    %1838 = vmatpush1.msra.mxu0 0.0
    %1839 = vmatprep.subr.mxu0 0.0
    %1840 = vmatpush1.msra.mxu0 0.0
    %1841 = vmatprep.subr.mxu0 0.0
    %1842 = vmatpush1.msra.mxu0 0.0
    %1843 = vmatprep.subr.mxu0 0.0
    %1844 = vmatpush1.msra.mxu0 0.0
    %1845 = vmatprep.subr.mxu0 0.0
    %1846 = vmatpush1.msra.mxu0 0.0
    %1847 = vmatprep.subr.mxu0 0.0
    %1848 = vmatpush1.msra.mxu0 0.0
    %1849 = vmatprep.mubr.f32.mxu0 0.0
    %1850 = vmatmul.mubr.f32.gmra.mrb[0].mxu0 %v1780
    %v1851 = vpop.f32.mrb[0].mxu0
    %v1852 = vadd.f32 0.0, %v1851
    %v1853 = vpop.f32.mrb[0].mxu0
    %1854 = vmatprep.mubr.f32.mxu0 0.0
    %1855 = vmatmul.mubr.f32.gmra.mrb[0].mxu0 %v1783
    %v1856 = vpop.f32.mrb[0].mxu0
    %v1857 = vadd.f32 0.0, %v1856
    %v1858 = vpop.f32.mrb[0].mxu0
    %1859 = vdwg.mxu0
    %v1861 = vsel %vm1528, %v1615, 0
    %v1864 = vsel %vm1528, %v1616, 0
    %1866 = vmatprep.subr.mxu0 0.0
    %1867 = vmatpush1.msra.mxu0 %v1108
    %1868 = vmatprep.subr.mxu0 0.0
    %1869 = vmatpush1.msra.mxu0 %v1176
    %1870 = vmatprep.subr.mxu0 0.0
    %1871 = vmatpush1.msra.mxu0 0.0
    %1872 = vmatprep.subr.mxu0 0.0
    %1873 = vmatpush1.msra.mxu0 0.0
    %1874 = vmatprep.subr.mxu0 0.0
    %1875 = vmatpush1.msra.mxu0 0.0
    %1876 = vmatprep.subr.mxu0 0.0
    %1877 = vmatpush1.msra.mxu0 0.0
    %1878 = vmatprep.subr.mxu0 0.0
    %1879 = vmatpush1.msra.mxu0 0.0
    %1880 = vmatprep.subr.mxu0 0.0
    %1881 = vmatpush1.msra.mxu0 0.0
    %1882 = vmatprep.subr.mxu0 0.0
    %1883 = vmatpush1.msra.mxu0 0.0
    %1884 = vmatprep.subr.mxu0 0.0
    %1885 = vmatpush1.msra.mxu0 0.0
    %1886 = vmatprep.subr.mxu0 0.0
    %1887 = vmatpush1.msra.mxu0 0.0
    %1888 = vmatprep.subr.mxu0 0.0
    %1889 = vmatpush1.msra.mxu0 0.0
    %1890 = vmatprep.subr.mxu0 0.0
    %1891 = vmatpush1.msra.mxu0 0.0
    %1892 = vmatprep.subr.mxu0 0.0
    %1893 = vmatpush1.msra.mxu0 0.0
    %1894 = vmatprep.subr.mxu0 0.0
    %1895 = vmatpush1.msra.mxu0 0.0
    %1896 = vmatprep.subr.mxu0 0.0
    %1897 = vmatpush1.msra.mxu0 0.0
    %1898 = vmatprep.subr.mxu0 0.0
    %1899 = vmatpush1.msra.mxu0 0.0
    %1900 = vmatprep.subr.mxu0 0.0
    %1901 = vmatpush1.msra.mxu0 0.0
    %1902 = vmatprep.subr.mxu0 0.0
    %1903 = vmatpush1.msra.mxu0 0.0
    %1904 = vmatprep.subr.mxu0 0.0
    %1905 = vmatpush1.msra.mxu0 0.0
    %1906 = vmatprep.subr.mxu0 0.0
    %1907 = vmatpush1.msra.mxu0 0.0
    %1908 = vmatprep.subr.mxu0 0.0
    %1909 = vmatpush1.msra.mxu0 0.0
    %1910 = vmatprep.subr.mxu0 0.0
    %1911 = vmatpush1.msra.mxu0 0.0
    %1912 = vmatprep.subr.mxu0 0.0
    %1913 = vmatpush1.msra.mxu0 0.0
    %1914 = vmatprep.subr.mxu0 0.0
    %1915 = vmatpush1.msra.mxu0 0.0
    %1916 = vmatprep.subr.mxu0 0.0
    %1917 = vmatpush1.msra.mxu0 0.0
    %1918 = vmatprep.subr.mxu0 0.0
    %1919 = vmatpush1.msra.mxu0 0.0
    %1920 = vmatprep.subr.mxu0 0.0
    %1921 = vmatpush1.msra.mxu0 0.0
    %1922 = vmatprep.subr.mxu0 0.0
    %1923 = vmatpush1.msra.mxu0 0.0
    %1924 = vmatprep.subr.mxu0 0.0
    %1925 = vmatpush1.msra.mxu0 0.0
    %1926 = vmatprep.subr.mxu0 0.0
    %1927 = vmatpush1.msra.mxu0 0.0
    %1928 = vmatprep.subr.mxu0 0.0
    %1929 = vmatpush1.msra.mxu0 0.0
    %1930 = vmatprep.mubr.f32.mxu0 0.0
    %1931 = vmatmul.mubr.f32.gmra.mrb[0].mxu0 %v1861
    %v1932 = vpop.f32.mrb[0].mxu0
    %v1933 = vadd.f32 0.0, %v1932
    %v1934 = vpop.f32.mrb[0].mxu0
    %1935 = vmatprep.mubr.f32.mxu0 0.0
    %1936 = vmatmul.mubr.f32.gmra.mrb[0].mxu0 %v1864
    %v1937 = vpop.f32.mrb[0].mxu0
    %v1938 = vadd.f32 0.0, %v1937
    %v1939 = vpop.f32.mrb[0].mxu0
    %1940 = vdwg.mxu0
    %v1941 = vcombine.low %v1690, %v1852
    %v1942 = vcombine.high %v1690, %v1852
    %v1944 = vunpack.c.l.s4 1983009808
    %v1945 = vunpack.c.0.s8 %v1944
    %v1946 = vlaneseq
    %v1947 = vshrl.u32 %v1946, 7
    %v1948 = vsub.s32 %v1945, %v1947
    %v1949 = vrot.slane %v1941, %v1948
    %v1951 = vunpack.c.l.s4 1983009808
    %v1952 = vunpack.c.0.s8 %v1951
    %v1953 = vlaneseq
    %v1954 = vshrl.u32 %v1953, 7
    %v1955 = vsub.s32 %v1952, %v1954
    %v1956 = vrot.slane %v1942, %v1955
    %v1957 = vcombine.low %v1771, %v1933
    %v1958 = vcombine.high %v1771, %v1933
    %v1960 = vunpack.c.l.s4 1983009808
    %v1961 = vunpack.c.0.s8 %v1960
    %v1962 = vlaneseq
    %v1963 = vshrl.u32 %v1962, 7
    %v1964 = vsub.s32 %v1961, %v1963
    %v1965 = vrot.slane %v1957, %v1964
    %v1967 = vunpack.c.l.s4 1983009808
    %v1968 = vunpack.c.0.s8 %v1967
    %v1969 = vlaneseq
    %v1970 = vshrl.u32 %v1969, 7
    %v1971 = vsub.s32 %v1968, %v1970
    %v1972 = vrot.slane %v1958, %v1971
    %v1973 = vcombine.low %v1949, %v1965
    %v1974 = vcombine.high %v1949, %v1965
    %v1976 = vunpack.c.l.s4 1934713408
    %v1977 = vunpack.c.0.s8 %v1976
    %v1978 = vlaneseq
    %v1979 = vshrl.u32 %v1978, 7
    %v1980 = vsub.s32 %v1977, %v1979
    %v1981 = vrot.slane %v1973, %v1980
    %v1983 = vunpack.c.l.s4 1934713408
    %v1984 = vunpack.c.0.s8 %v1983
    %v1985 = vlaneseq
    %v1986 = vshrl.u32 %v1985, 7
    %v1987 = vsub.s32 %v1984, %v1986
    %v1988 = vrot.slane %v1974, %v1987
    %v1989 = vcombine.low %v1956, %v1972
    %v1990 = vcombine.high %v1956, %v1972
    %v1992 = vunpack.c.l.s4 1934713408
    %v1993 = vunpack.c.0.s8 %v1992
    %v1994 = vlaneseq
    %v1995 = vshrl.u32 %v1994, 7
    %v1996 = vsub.s32 %v1993, %v1995
    %v1997 = vrot.slane %v1989, %v1996
    %v1999 = vunpack.c.l.s4 1934713408
    %v2000 = vunpack.c.0.s8 %v1999
    %v2001 = vlaneseq
    %v2002 = vshrl.u32 %v2001, 7
    %v2003 = vsub.s32 %v2000, %v2002
    %v2004 = vrot.slane %v1990, %v2003
    %v2005 = vcombine.high %v1981, 0.0
    %v2006 = vcombine.high %v1988, 0.0
    %v2007 = vcombine.high %v1997, 0.0
    %v2008 = vcombine.high %v2004, 0.0
    %v2009 = vcombine.low %v1695, %v1857
    %v2010 = vcombine.high %v1695, %v1857
    %v2012 = vunpack.c.l.s4 1983009808
    %v2013 = vunpack.c.0.s8 %v2012
    %v2014 = vlaneseq
    %v2015 = vshrl.u32 %v2014, 7
    %v2016 = vsub.s32 %v2013, %v2015
    %v2017 = vrot.slane %v2009, %v2016
    %v2019 = vunpack.c.l.s4 1983009808
    %v2020 = vunpack.c.0.s8 %v2019
    %v2021 = vlaneseq
    %v2022 = vshrl.u32 %v2021, 7
    %v2023 = vsub.s32 %v2020, %v2022
    %v2024 = vrot.slane %v2010, %v2023
    %v2025 = vcombine.low %v1776, %v1938
    %v2026 = vcombine.high %v1776, %v1938
    %v2028 = vunpack.c.l.s4 1983009808
    %v2029 = vunpack.c.0.s8 %v2028
    %v2030 = vlaneseq
    %v2031 = vshrl.u32 %v2030, 7
    %v2032 = vsub.s32 %v2029, %v2031
    %v2033 = vrot.slane %v2025, %v2032
    %v2035 = vunpack.c.l.s4 1983009808
    %v2036 = vunpack.c.0.s8 %v2035
    %v2037 = vlaneseq
    %v2038 = vshrl.u32 %v2037, 7
    %v2039 = vsub.s32 %v2036, %v2038
    %v2040 = vrot.slane %v2026, %v2039
    %v2041 = vcombine.low %v2017, %v2033
    %v2042 = vcombine.high %v2017, %v2033
    %v2044 = vunpack.c.l.s4 1934713408
    %v2045 = vunpack.c.0.s8 %v2044
    %v2046 = vlaneseq
    %v2047 = vshrl.u32 %v2046, 7
    %v2048 = vsub.s32 %v2045, %v2047
    %v2049 = vrot.slane %v2041, %v2048
    %v2051 = vunpack.c.l.s4 1934713408
    %v2052 = vunpack.c.0.s8 %v2051
    %v2053 = vlaneseq
    %v2054 = vshrl.u32 %v2053, 7
    %v2055 = vsub.s32 %v2052, %v2054
    %v2056 = vrot.slane %v2042, %v2055
    %v2057 = vcombine.low %v2024, %v2040
    %v2058 = vcombine.high %v2024, %v2040
    %v2060 = vunpack.c.l.s4 1934713408
    %v2061 = vunpack.c.0.s8 %v2060
    %v2062 = vlaneseq
    %v2063 = vshrl.u32 %v2062, 7
    %v2064 = vsub.s32 %v2061, %v2063
    %v2065 = vrot.slane %v2057, %v2064
    %v2067 = vunpack.c.l.s4 1934713408
    %v2068 = vunpack.c.0.s8 %v2067
    %v2069 = vlaneseq
    %v2070 = vshrl.u32 %v2069, 7
    %v2071 = vsub.s32 %v2068, %v2070
    %v2072 = vrot.slane %v2058, %v2071
    %v2073 = vcombine.high %v2049, 0.0
    %v2074 = vcombine.high %v2056, 0.0
    %v2075 = vcombine.high %v2065, 0.0
    %v2076 = vcombine.high %v2072, 0.0
    %v2077 = vcombine.low %v1981, %v1988
    %v2079 = vunpack.c.l.s4 1983009808
    %v2080 = vunpack.c.0.s8 %v2079
    %v2081 = vlaneseq
    %v2082 = vshrl.u32 %v2081, 7
    %v2083 = vsub.s32 %v2080, %v2082
    %v2084 = vrot.slane %v2077, %v2083
    %v2085 = vcombine.low %v2005, %v2006
    %v2087 = vunpack.c.l.s4 1983009808
    %v2088 = vunpack.c.0.s8 %v2087
    %v2089 = vlaneseq
    %v2090 = vshrl.u32 %v2089, 7
    %v2091 = vsub.s32 %v2088, %v2090
    %v2092 = vrot.slane %v2085, %v2091
    %v2093 = vcombine.low %v1997, %v2004
    %v2095 = vunpack.c.l.s4 1983009808
    %v2096 = vunpack.c.0.s8 %v2095
    %v2097 = vlaneseq
    %v2098 = vshrl.u32 %v2097, 7
    %v2099 = vsub.s32 %v2096, %v2098
    %v2100 = vrot.slane %v2093, %v2099
    %v2101 = vcombine.low %v2007, %v2008
    %v2103 = vunpack.c.l.s4 1983009808
    %v2104 = vunpack.c.0.s8 %v2103
    %v2105 = vlaneseq
    %v2106 = vshrl.u32 %v2105, 7
    %v2107 = vsub.s32 %v2104, %v2106
    %v2108 = vrot.slane %v2101, %v2107
    %v2109 = vcombine.low %v2084, %v2092
    %v2110 = vcombine.high %v2084, %v2092
    %v2112 = vunpack.c.l.s4 1934713408
    %v2113 = vunpack.c.0.s8 %v2112
    %v2114 = vlaneseq
    %v2115 = vshrl.u32 %v2114, 7
    %v2116 = vsub.s32 %v2113, %v2115
    %v2117 = vrot.slane %v2109, %v2116
    %v2119 = vunpack.c.l.s4 1934713408
    %v2120 = vunpack.c.0.s8 %v2119
    %v2121 = vlaneseq
    %v2122 = vshrl.u32 %v2121, 7
    %v2123 = vsub.s32 %v2120, %v2122
    %v2124 = vrot.slane %v2110, %v2123
    %v2125 = vcombine.low %v2100, %v2108
    %v2126 = vcombine.high %v2100, %v2108
    %v2128 = vunpack.c.l.s4 1934713408
    %v2129 = vunpack.c.0.s8 %v2128
    %v2130 = vlaneseq
    %v2131 = vshrl.u32 %v2130, 7
    %v2132 = vsub.s32 %v2129, %v2131
    %v2133 = vrot.slane %v2125, %v2132
    %v2135 = vunpack.c.l.s4 1934713408
    %v2136 = vunpack.c.0.s8 %v2135
    %v2137 = vlaneseq
    %v2138 = vshrl.u32 %v2137, 7
    %v2139 = vsub.s32 %v2136, %v2138
    %v2140 = vrot.slane %v2126, %v2139
    %v2141 = vcombine.low %v2117, %v2133
    %v2142 = vcombine.high %v2117, %v2133
    %v2143 = vcombine.low %v2124, %v2140
    %v2144 = vcombine.high %v2124, %v2140
    %v2145 = vcombine.low %v2049, %v2056
    %v2147 = vunpack.c.l.s4 1983009808
    %v2148 = vunpack.c.0.s8 %v2147
    %v2149 = vlaneseq
    %v2150 = vshrl.u32 %v2149, 7
    %v2151 = vsub.s32 %v2148, %v2150
    %v2152 = vrot.slane %v2145, %v2151
    %v2153 = vcombine.low %v2073, %v2074
    %v2155 = vunpack.c.l.s4 1983009808
    %v2156 = vunpack.c.0.s8 %v2155
    %v2157 = vlaneseq
    %v2158 = vshrl.u32 %v2157, 7
    %v2159 = vsub.s32 %v2156, %v2158
    %v2160 = vrot.slane %v2153, %v2159
    %v2161 = vcombine.low %v2065, %v2072
    %v2163 = vunpack.c.l.s4 1983009808
    %v2164 = vunpack.c.0.s8 %v2163
    %v2165 = vlaneseq
    %v2166 = vshrl.u32 %v2165, 7
    %v2167 = vsub.s32 %v2164, %v2166
    %v2168 = vrot.slane %v2161, %v2167
    %v2169 = vcombine.low %v2075, %v2076
    %v2171 = vunpack.c.l.s4 1983009808
    %v2172 = vunpack.c.0.s8 %v2171
    %v2173 = vlaneseq
    %v2174 = vshrl.u32 %v2173, 7
    %v2175 = vsub.s32 %v2172, %v2174
    %v2176 = vrot.slane %v2169, %v2175
    %v2177 = vcombine.low %v2152, %v2160
    %v2178 = vcombine.high %v2152, %v2160
    %v2180 = vunpack.c.l.s4 1934713408
    %v2181 = vunpack.c.0.s8 %v2180
    %v2182 = vlaneseq
    %v2183 = vshrl.u32 %v2182, 7
    %v2184 = vsub.s32 %v2181, %v2183
    %v2185 = vrot.slane %v2177, %v2184
    %v2187 = vunpack.c.l.s4 1934713408
    %v2188 = vunpack.c.0.s8 %v2187
    %v2189 = vlaneseq
    %v2190 = vshrl.u32 %v2189, 7
    %v2191 = vsub.s32 %v2188, %v2190
    %v2192 = vrot.slane %v2178, %v2191
    %v2193 = vcombine.low %v2168, %v2176
    %v2194 = vcombine.high %v2168, %v2176
    %v2196 = vunpack.c.l.s4 1934713408
    %v2197 = vunpack.c.0.s8 %v2196
    %v2198 = vlaneseq
    %v2199 = vshrl.u32 %v2198, 7
    %v2200 = vsub.s32 %v2197, %v2199
    %v2201 = vrot.slane %v2193, %v2200
    %v2203 = vunpack.c.l.s4 1934713408
    %v2204 = vunpack.c.0.s8 %v2203
    %v2205 = vlaneseq
    %v2206 = vshrl.u32 %v2205, 7
    %v2207 = vsub.s32 %v2204, %v2206
    %v2208 = vrot.slane %v2194, %v2207
    %v2209 = vcombine.low %v2185, %v2201
    %v2210 = vcombine.high %v2185, %v2201
    %v2211 = vcombine.low %v2192, %v2208
    %v2212 = vcombine.high %v2192, %v2208
    %2215 = vrot.lane.b32.xlu0 %v2142, 8
    %v2216 = vpop.permute.xlu0 %2215
    %2217 = vrot.lane.b32.xlu0 %v2210, 8
    %v2218 = vpop.permute.xlu0 %2217
    %2223 = vrot.lane.b32.xlu0 %v2143, 16
    %v2224 = vpop.permute.xlu0 %2223
    %2225 = vrot.lane.b32.xlu0 %v2211, 16
    %v2226 = vpop.permute.xlu0 %2225
    %2231 = vrot.lane.b32.xlu0 %v2144, 24
    %v2232 = vpop.permute.xlu0 %2231
    %2233 = vrot.lane.b32.xlu0 %v2212, 24
    %v2234 = vpop.permute.xlu0 %2233
    %v2237 = vsel %vm1179, %v2141, %v2216
    %v2238 = vsel %vm1179, %v2209, %v2218
    %v2239 = vsel %vm1528, %v2237, %v2224
    %v2240 = vsel %vm1528, %v2238, %v2226
    %vm2241 = vcmask 195584
    %v2242 = vsel %vm2241, %v2239, %v2232
    %v2243 = vsel %vm2241, %v2240, %v2234
    %v2244 = vlaneseq
    %v2245 = vshrl.u32 %v2244, 7
    %v2246 = vsub.s32 2, %v2245
    %v2247 = vrot.slane %v93, %v2246
    %2248 = vrot.lane.b32.xlu0 %v89, 32
    %v2249 = vpop.permute.xlu0 %2248
    %2250 = vrot.lane.b32.xlu0 %v90, 32
    %v2251 = vpop.permute.xlu0 %2250
    %2252 = vrot.lane.b32.xlu0 %v91, 32
    %v2253 = vpop.permute.xlu0 %2252
    %2254 = vrot.lane.b32.xlu0 %v92, 32
    %v2255 = vpop.permute.xlu0 %2254
    %v2261 = vsel %vm94, %v2242, 0
    %v2264 = vsel %vm94, %v2243, 0
    %2266 = vmatprep.subr.mxu0 0.0
    %2267 = vmatpush1.msra.mxu0 %v2249
    %2268 = vmatprep.subr.mxu0 0.0
    %2269 = vmatpush1.msra.mxu0 %v2251
    %2270 = vmatprep.subr.mxu0 0.0
    %2271 = vmatpush1.msra.mxu0 %v2253
    %2272 = vmatprep.subr.mxu0 0.0
    %2273 = vmatpush1.msra.mxu0 %v2255
    %2274 = vmatprep.subr.mxu0 0.0
    %2275 = vmatpush1.msra.mxu0 0.0
    %2276 = vmatprep.subr.mxu0 0.0
    %2277 = vmatpush1.msra.mxu0 0.0
    %2278 = vmatprep.subr.mxu0 0.0
    %2279 = vmatpush1.msra.mxu0 0.0
    %2280 = vmatprep.subr.mxu0 0.0
    %2281 = vmatpush1.msra.mxu0 0.0
    %2282 = vmatprep.subr.mxu0 0.0
    %2283 = vmatpush1.msra.mxu0 0.0
    %2284 = vmatprep.subr.mxu0 0.0
    %2285 = vmatpush1.msra.mxu0 0.0
    %2286 = vmatprep.subr.mxu0 0.0
    %2287 = vmatpush1.msra.mxu0 0.0
    %2288 = vmatprep.subr.mxu0 0.0
    %2289 = vmatpush1.msra.mxu0 0.0
    %2290 = vmatprep.subr.mxu0 0.0
    %2291 = vmatpush1.msra.mxu0 0.0
    %2292 = vmatprep.subr.mxu0 0.0
    %2293 = vmatpush1.msra.mxu0 0.0
    %2294 = vmatprep.subr.mxu0 0.0
    %2295 = vmatpush1.msra.mxu0 0.0
    %2296 = vmatprep.subr.mxu0 0.0
    %2297 = vmatpush1.msra.mxu0 0.0
    %2298 = vmatprep.subr.mxu0 0.0
    %2299 = vmatpush1.msra.mxu0 0.0
    %2300 = vmatprep.subr.mxu0 0.0
    %2301 = vmatpush1.msra.mxu0 0.0
    %2302 = vmatprep.subr.mxu0 0.0
    %2303 = vmatpush1.msra.mxu0 0.0
    %2304 = vmatprep.subr.mxu0 0.0
    %2305 = vmatpush1.msra.mxu0 0.0
    %2306 = vmatprep.subr.mxu0 0.0
    %2307 = vmatpush1.msra.mxu0 0.0
    %2308 = vmatprep.subr.mxu0 0.0
    %2309 = vmatpush1.msra.mxu0 0.0
    %2310 = vmatprep.subr.mxu0 0.0
    %2311 = vmatpush1.msra.mxu0 0.0
    %2312 = vmatprep.subr.mxu0 0.0
    %2313 = vmatpush1.msra.mxu0 0.0
    %2314 = vmatprep.subr.mxu0 0.0
    %2315 = vmatpush1.msra.mxu0 0.0
    %2316 = vmatprep.subr.mxu0 0.0
    %2317 = vmatpush1.msra.mxu0 0.0
    %2318 = vmatprep.subr.mxu0 0.0
    %2319 = vmatpush1.msra.mxu0 0.0
    %2320 = vmatprep.subr.mxu0 0.0
    %2321 = vmatpush1.msra.mxu0 0.0
    %2322 = vmatprep.subr.mxu0 0.0
    %2323 = vmatpush1.msra.mxu0 0.0
    %2324 = vmatprep.subr.mxu0 0.0
    %2325 = vmatpush1.msra.mxu0 0.0
    %2326 = vmatprep.subr.mxu0 0.0
    %2327 = vmatpush1.msra.mxu0 0.0
    %2328 = vmatprep.subr.mxu0 0.0
    %2329 = vmatpush1.msra.mxu0 0.0
    %2330 = vmatprep.mubr.f32.mxu0 0.0
    %2331 = vmatmul.mubr.f32.gmra.mrb[0].mxu0 %v2261
    %v2332 = vpop.f32.mrb[0].mxu0
    %v2333 = vadd.f32 %v2247, %v2332
    %v2334 = vpop.f32.mrb[0].mxu0
    %2335 = vmatprep.mubr.f32.mxu0 0.0
    %2336 = vmatmul.mubr.f32.gmra.mrb[0].mxu0 %v2264
    %v2337 = vpop.f32.mrb[0].mxu0
    %v2338 = vadd.f32 %v2247, %v2337
    %v2339 = vpop.f32.mrb[0].mxu0
    %2340 = vdwg.mxu0
    %v2341 = vadd.f32 %v83, %v2333
    %v2342 = vadd.f32 %v84, %v2338
    %v2343 = vsel %vm94, %v2341, 0.0
    %2344 = vadd.xlane.f32.xlu0 %v2343
    %v2345 = vpop.xlane.xlu0 %2344
    %v2346 = vsel %vm94, %v2342, 0.0
    %2347 = vadd.xlane.f32.xlu0 %v2346
    %v2348 = vpop.xlane.xlu0 %2347
    %v2349 = vrcp.pop 32.0
    %v2350 = vmul.f32 %v2345, %v2349
    %v2351 = vmul.f32 %v2348, %v2349
    %v2352 = vsub.f32 %v2341, %v2350
    %v2353 = vsub.f32 %v2342, %v2351
    %v2354 = vmul.f32 %v2352, %v2352
    %v2355 = vmul.f32 %v2353, %v2353
    %v2356 = vsel %vm94, %v2354, 0.0
    %2357 = vadd.xlane.f32.xlu0 %v2356
    %v2358 = vpop.xlane.xlu0 %2357
    %v2359 = vsel %vm94, %v2355, 0.0
    %2360 = vadd.xlane.f32.xlu0 %v2359
    %v2361 = vpop.xlane.xlu0 %2360
    %v2362 = vmul.f32 %v2358, %v2349
    %v2363 = vmul.f32 %v2361, %v2349
    %v2364 = vadd.f32 %v2362, 1e-05
    %v2365 = vadd.f32 %v2363, 1e-05
    %v2366 = vrsqrt.pop %v2364
    %v2367 = vrsqrt.pop %v2365
    %v2368 = vmul.f32 %v2352, %v2366
    %v2369 = vmul.f32 %v2353, %v2367
    %v2370 = vlaneseq
    %v2371 = vshrl.u32 %v2370, 7
    %v2372 = vsub.s32 3, %v2371
    %v2373 = vrot.slane %v93, %v2372
    %v2374 = vmul.f32 %v2368, %v2373
    %v2375 = vmul.f32 %v2369, %v2373
    %v2376 = vlaneseq
    %v2377 = vshrl.u32 %v2376, 7
    %v2378 = vsub.s32 4, %v2377
    %v2379 = vrot.slane %v93, %v2378
    %v2380 = vadd.f32 %v2374, %v2379
    %v2381 = vadd.f32 %v2375, %v2379
    %2382 = vst.msk [vmem:[#allocation2] sm:$0xff] %vm94, %v2380
    %2383 = vst.msk [vmem:[#allocation2 + $0x8] sm:$0xff] %vm94, %v2381
    // Predicated region
    $region42: #{self_attention_stack.1} parent=1 // pred_check
      %p2384 = pneg %p74
    $region43: #{self_attention_stack.1} parent=1 // pred_check_branch
      %2386 = sbr.rel (%p2384) target = $region45
    $region44: #{self_attention_stack.1} parent=1 // pred_region
      %2387 = vst.msk [vmem:[#allocation11] sm:$0xff] %vm94, %v2380
      %2388 = vst.msk [vmem:[#allocation11 + $0x8] sm:$0xff] %vm94, %v2381
    $region45: #{self_attention_stack.1} parent=1 // pred_fallthru
      _
    // Predicated region
    $region46: #{self_attention_stack.1} parent=1 // pred_check
      _
    $region47: #{self_attention_stack.1} parent=1 // pred_check_branch
      %2390 = sbr.rel (0) target = $region49
    $region48: #{self_attention_stack.1} parent=1 // pred_region
      %s2392 = ssub.s32 256, 256
      %2393 = vsyncadd [#allocation5], %s2392
      %s2394 = sshll.u32 [#allocation11], 4
      %s2395 = int_to_ptr.vmem [resolvable:$true] %s2394
      %2400 = dma.vmem_to_hbm [thread:$0]  %s2395, 256, %s5, [#allocation5], 128, 128, 8
    $region49: #{self_attention_stack.1} parent=1 // pred_fallthru
      _
    // Predicated region
    $region50: #{self_attention_stack.1} parent=1 // pred_check
      _
    $region51: #{self_attention_stack.1} parent=1 // pred_check_branch
      %2402 = sbr.rel (0) target = $region53
    $region52: #{self_attention_stack.1} parent=1 // pred_region
      %2403 = dma.done [#allocation5], 256
    $region53: #{self_attention_stack.1} parent=1 // pred_fallthru
      _
    %2404 = vsyncpa [#allocation4], 1
    %2405 = vsyncpa [#allocation7], 1
    %2406 = vsyncpa [#allocation10], 1
    %2407 = vsyncpa [#allocation5], 1

</llo_original>
